<compile_context>
chip_gen: v7x
topology: tpu7x:2x2x1
jax: 0.10.0
libtpu: 0.0.40
codegen_flags: <defaults>
</compile_context>

<pallas_src>
import functools

import jax
import jax.numpy as jnp
import numpy as np
from jax import lax
from jax.experimental import pallas as pl
from jax.experimental.pallas import tpu as pltpu


def _round_up(x, m):
    return ((x + m - 1) // m) * m


def _cdiv(a, b):
    return -(-a // b)


# ----------------------------------------------------------------------------
# Pallas kernel: chunked sequential GRU recurrence (hidden-side matmul only).
# ----------------------------------------------------------------------------
def _gru_recurrence_kernel(nch_ref, g_ref, len_ref, whh_ref, bhn_ref,
                           out_ref, h_ref, *, chunk, ep, unroll):
    # grid = (batch_blocks, time_chunks); axis 1 is the recurrence axis.
    b = pl.program_id(0)
    c = pl.program_id(1)

    @pl.when(c == 0)
    def _init():
        h_ref[...] = jnp.zeros_like(h_ref)
        out_ref[...] = jnp.zeros_like(out_ref)

    # Skip chunks past the longest sequence in this batch block (ragged skip).
    @pl.when(c < nch_ref[b])
    def _body():
        whh = whh_ref[...]                 # (Ep, 3Ep), possibly bf16
        whh_rz = whh[:, :2 * ep]           # [r|z] hidden weights
        whh_n = whh[:, 2 * ep:]            # [n]   hidden weights
        bhn = bhn_ref[...]                 # (1, Ep) f32
        lengths = len_ref[...]             # (Bb, 1) int32
        t0 = c * chunk                     # global time offset of this chunk

        def step(i, carry):
            h, out = carry                                    # (Bb, Ep) f32 each
            g = g_ref[i]                                      # (Bb, 3Ep): x-side gates + biases
            h_c = h.astype(whh.dtype)
            # Split hidden matmul: r|z pass and n pass -> EUP sigmoids on r/z
            # can overlap the MXU pass for n (shorter serial critical path).
            gh_rz = jnp.dot(h_c, whh_rz, preferred_element_type=jnp.float32)
            gh_n = jnp.dot(h_c, whh_n, preferred_element_type=jnp.float32)
            # PyTorch GRU gate order: r, z, n (one Ep-wide lane segment each).
            r = jax.nn.sigmoid(g[:, :ep].astype(jnp.float32) + gh_rz[:, :ep])
            z = jax.nn.sigmoid(g[:, ep:2 * ep].astype(jnp.float32) + gh_rz[:, ep:])
            n = jnp.tanh(g[:, 2 * ep:].astype(jnp.float32) + r * (gh_n + bhn))
            h_new = (1.0 - z) * n + z * h
            # Capture h_t for rows whose (1-based) final step is t0 + i + 1.
            is_final = lengths == (t0 + i + 1)                # (Bb, 1) bool
            out = jnp.where(is_final, h_new, out)
            return h_new, out

        # Partial unroll keeps LLO visibility without vreg-pressure blowups.
        h, out = lax.fori_loop(0, chunk, step,
                               (h_ref[...], out_ref[...]), unroll=unroll)
        h_ref[...] = h
        out_ref[...] = out     # lane-dense full-tile store once per chunk


def gru_final_states(n_chunks, g_all, lengths_p, whh_p, bhn_p, *,
                     block_b, chunk, unroll, ep):
    """n_chunks: (nb,) i32, g_all: (Tp, Bp, 3Ep), lengths_p: (Bp, 1) i32,
    whh_p: (Ep, 3Ep), bhn_p: (1, Ep) f32.  Returns (Bp, Ep) f32."""
    tp, bp, three_ep = g_all.shape
    nb = bp // block_b
    nc = tp // chunk

    kernel = functools.partial(_gru_recurrence_kernel,
                               chunk=chunk, ep=ep, unroll=unroll)

    # Generation-aware VMEM budget: ~75% of physical VMEM, safe fallback.
    g_bytes = jnp.dtype(g_all.dtype).itemsize
    w_bytes = jnp.dtype(whh_p.dtype).itemsize
    est = (2 * chunk * block_b * three_ep * g_bytes   # G slab, double buffered
           + 2 * ep * three_ep * w_bytes              # W_hh
           + 2 * (ep * 4 + block_b * 4)               # b_hn + lengths
           + 2 * block_b * ep * 4                     # output block
           + block_b * ep * 4)                        # h scratch
    try:
        info = pltpu.get_tpu_info()
        vmem_cap = int(getattr(info, "vmem_capacity_bytes", 64 * 1024 * 1024))
    except Exception:
        vmem_cap = 64 * 1024 * 1024
    vmem_limit = int(min(max(2 * est, 32 * 1024 * 1024),
                         int(vmem_cap * 0.75)))

    return pl.pallas_call(
        kernel,
        out_shape=jax.ShapeDtypeStruct((bp, ep), jnp.float32),
        grid_spec=pltpu.PrefetchScalarGridSpec(
            num_scalar_prefetch=1,           # n_chunks lands in SMEM
            grid=(nb, nc),
            in_specs=[
                # Precomputed input-side gates, one (Tc, Bb, 3Ep) slab per step;
                # index clamped so dead (skipped) chunks don't re-fetch HBM.
                pl.BlockSpec((chunk, block_b, three_ep),
                             lambda b, c, nch: (jnp.minimum(c, nch[b] - 1), b, 0)),
                # Per-row lengths (constant over the time axis).
                pl.BlockSpec((block_b, 1), lambda b, c, nch: (b, 0)),
                # Fused hidden-to-hidden weights / new-gate hidden bias
                # (constant index_map -> fetched once by the pipeline).
                pl.BlockSpec((ep, three_ep), lambda b, c, nch: (0, 0)),
                pl.BlockSpec((1, ep), lambda b, c, nch: (0, 0)),
            ],
            out_specs=pl.BlockSpec((block_b, ep), lambda b, c, nch: (b, 0)),
            scratch_shapes=[pltpu.VMEM((block_b, ep), jnp.float32)],  # hidden h
        ),
        compiler_params=pltpu.CompilerParams(
            dimension_semantics=("parallel", "arbitrary"),
            vmem_limit_bytes=vmem_limit,
        ),
    )(n_chunks, g_all, lengths_p, whh_p, bhn_p)


# ----------------------------------------------------------------------------
# Parameter preparation (hoisted out of the per-call path).
# ----------------------------------------------------------------------------
def init_params(key, emb_size, num_embeddings=10):
    k_emb, k_wih, k_whh, k_bih, k_bhh = jax.random.split(key, 5)
    E = emb_size
    bound = 1.0 / np.sqrt(E)
    return {
        "embedding": jax.random.normal(k_emb, (num_embeddings, E), jnp.float32),
        "w_ih": jax.random.uniform(k_wih, (3 * E, E), jnp.float32, -bound, bound),
        "w_hh": jax.random.uniform(k_whh, (3 * E, E), jnp.float32, -bound, bound),
        "b_ih": jax.random.uniform(k_bih, (3 * E,), jnp.float32, -bound, bound),
        "b_hh": jax.random.uniform(k_bhh, (3 * E,), jnp.float32, -bound, bound),
    }


def prepare_gru_params(params, *, compute_dtype=jnp.float32):
    """Fuse + pad GRU parameters once (gate order r, z, n; lane-padded to Ep)."""
    emb = params["embedding"].astype(jnp.float32)
    E = emb.shape[1]
    Ep = _round_up(E, 128)
    w_ih, w_hh = params["w_ih"], params["w_hh"]
    b_ih, b_hh = params["b_ih"], params["b_hh"]

    def fuse_pad(w):                                   # (3E, E) -> (Ep, 3Ep)
        w3 = jnp.transpose(w.reshape(3, E, E), (0, 2, 1))      # (gate, in, out)
        w3 = jnp.pad(w3, ((0, 0), (0, Ep - E), (0, Ep - E)))
        return jnp.concatenate([w3[0], w3[1], w3[2]], axis=1)

    def pad_seg(v):
        return jnp.pad(v, (0, Ep - E))

    # Input-side bias row: fold b_ih and, for r/z, also b_hh (n keeps b_hn
    # separate because it is multiplied by r inside the kernel).
    b_i_p = jnp.concatenate([pad_seg(b_ih[0:E] + b_hh[0:E]),
                             pad_seg(b_ih[E:2 * E] + b_hh[E:2 * E]),
                             pad_seg(b_ih[2 * E:3 * E])])
    b_hn_p = pad_seg(b_hh[2 * E:3 * E])[None, :]               # (1, Ep)

    return {
        "E": E, "Ep": Ep,
        "embedding": emb,
        "w_ih_p": fuse_pad(w_ih).astype(compute_dtype),
        "w_hh_p": fuse_pad(w_hh).astype(compute_dtype),
        "b_i_p": b_i_p,
        "b_hn_p": b_hn_p,
        "compute_dtype": compute_dtype,
    }


# ----------------------------------------------------------------------------
# Module forward: gather + hoisted input projection (XLA) + Pallas recurrence.
# ----------------------------------------------------------------------------
def gru_sketch_embedding(params, sketchs, sketch_lengths, *,
                         chunk=32, unroll=8, compute_dtype=jnp.float32,
                         prepared=None):
    if prepared is None:
        prepared = prepare_gru_params(params, compute_dtype=compute_dtype)
    E, Ep = prepared["E"], prepared["Ep"]
    cdt = prepared["compute_dtype"]
    emb_tbl = prepared["embedding"]
    B, T = sketchs.shape

    # ---- Hardware-shaped padded dims. ---------------------------------------
    chunk = max(8, min(chunk, _round_up(max(T, 1), 8)))   # don't over-pad tiny T
    unroll = max(1, min(unroll, chunk))
    Tp = _round_up(T, chunk)

    Bp8 = _round_up(B, 8)
    if Bp8 <= 16:
        Bb = Bp8                                           # tiny batch: 1 block
    else:
        # >=2 blocks (feeds both v7x TensorCores), <=256 rows (full MXU width).
        nb_target = max(2, _cdiv(Bp8, 256))
        Bb = _round_up(_cdiv(Bp8, nb_target), 8)
    Bp = _round_up(B, Bb)
    nb = Bp // Bb

    # ---- Embedding lookup (plain-JAX glue; gather has no tile structure). ---
    x = emb_tbl[sketchs]                                   # (B, T, E) f32

    # ---- Pad activations and go time-major. ---------------------------------
    x_p = jnp.zeros((Bp, Tp, Ep), jnp.float32).at[:B, :T, :E].set(x)
    x_tbe = jnp.transpose(x_p, (1, 0, 2))                  # (Tp, Bp, Ep)

    # ---- Hoisted input projection: one big parallel matmul (off the serial
    #      critical path; fully MXU-efficient).  Stream G in compute_dtype. ---
    g_all = (jnp.dot(x_tbe.reshape(Tp * Bp, Ep).astype(cdt),
                     prepared["w_ih_p"],
                     preferred_element_type=jnp.float32)
             + prepared["b_i_p"]).astype(cdt)
    g_all = g_all.reshape(Tp, Bp, 3 * Ep)
    # TODO(synk): for very long sequences on v5e, fuse this projection into the
    # kernel per chunk to stream Ep-wide x instead of 3Ep-wide G (~3x less HBM).

    # Padded batch rows get length 0 -> never captured -> stay zero.
    lengths_p = jnp.zeros((Bp, 1), jnp.int32)
    lengths_p = lengths_p.at[:B, 0].set(sketch_lengths.astype(jnp.int32))

    # Per-batch-block live-chunk counts (ragged skip); min 1 so init runs.
    max_len_blk = jnp.max(lengths_p.reshape(nb, Bb), axis=1)
    n_chunks = jnp.maximum((max_len_blk + chunk - 1) // chunk, 1).astype(jnp.int32)

    out_p = gru_final_states(n_chunks, g_all, lengths_p,
                             prepared["w_hh_p"], prepared["b_hn_p"],
                             block_b=Bb, chunk=chunk, unroll=unroll, ep=Ep)
    return out_p[:B, :E]


# ----------------------------------------------------------------------------
# Pure-JAX reference (PyTorch-equivalent, for the correctness check).
# ----------------------------------------------------------------------------
def reference(params, sketchs, sketch_lengths):
    E = params["embedding"].shape[1]
    B = sketchs.shape[0]
    T = int(jnp.max(sketch_lengths))
    sketchs = sketchs[:, :T]
    x = params["embedding"][sketchs].astype(jnp.float32)      # (B, T, E)
    w_ih, w_hh = params["w_ih"], params["w_hh"]
    b_ih, b_hh = params["b_ih"], params["b_hh"]

    def step(h, x_t):
        gi = x_t @ w_ih.T + b_ih
        gh = h @ w_hh.T + b_hh
        r = jax.nn.sigmoid(gi[:, :E] + gh[:, :E])
        z = jax.nn.sigmoid(gi[:, E:2 * E] + gh[:, E:2 * E])
        n = jnp.tanh(gi[:, 2 * E:] + r * gh[:, 2 * E:])
        h = (1.0 - z) * n + z * h
        return h, h

    h0 = jnp.zeros((B, E), jnp.float32)
    _, hs = lax.scan(step, h0, jnp.transpose(x, (1, 0, 2)))   # (T, B, E)
    outs = jnp.transpose(hs, (1, 0, 2))                       # (B, T, E)
    return outs[jnp.arange(B), sketch_lengths - 1]


if __name__ == "__main__":
    B, SEQ, E = 2, 8, 32
    key = jax.random.PRNGKey(0)
    k_params, k_sketch = jax.random.split(key)

    params = init_params(k_params, E)
    sketchs = jax.random.randint(k_sketch, (B, SEQ), 0, 10, dtype=jnp.int32)
    sketch_lengths = jnp.array([5, 8], dtype=jnp.int32)

    # Fused/padded weights prepared ONCE (hoisted out of the per-call path).
    # Demo uses f32 matmuls so the strict tolerance check below holds;
    # pass compute_dtype=jnp.bfloat16 for 2x MXU / half the HBM stream in prod.
    prepared = prepare_gru_params(params, compute_dtype=jnp.float32)

    out = gru_sketch_embedding(params, sketchs, sketch_lengths,
                               chunk=32, unroll=8, prepared=prepared)
    out = jax.block_until_ready(out)

    ref = jax.block_until_ready(reference(params, sketchs, sketch_lengths))
    np.testing.assert_allclose(np.asarray(out), np.asarray(ref),
                               rtol=1e-5, atol=1e-5)
    print("KERNEL_OK")
</pallas_src>

<mosaic_0001>
module attributes {stable_mosaic.version = 11 : i64} {
  func.func @_gru_recurrence_kernel(%arg0: i32, %arg1: i32, %arg2: memref<1xi32, #tpu.memory_space<smem>>, %arg3: memref<8x8x384xf32, #tpu.memory_space<vmem>>, %arg4: memref<8x1xi32, #tpu.memory_space<vmem>>, %arg5: memref<128x384xf32, #tpu.memory_space<vmem>>, %arg6: memref<1x128xf32, #tpu.memory_space<vmem>>, %arg7: memref<8x128xf32, #tpu.memory_space<vmem>>, %arg8: memref<8x128xf32, #tpu.memory_space<vmem>>) attributes {dimension_semantics = [#tpu.dimension_semantics<parallel>, #tpu.dimension_semantics<arbitrary>], iteration_bounds = array<i64: 1, 1>, scalar_prefetch = 1 : i64, scratch_operands = 1 : i64, tpu.core_type = #tpu.core_type<tc>, window_params = [{transform_indices = @transform_0, window_bounds = array<i64: 8, 8, 384>}, {transform_indices = @transform_1, window_bounds = array<i64: 8, 1>}, {pipeline_mode = #tpu.pipeline_mode<synchronous>, transform_indices = @transform_2, window_bounds = array<i64: 128, 384>}, {pipeline_mode = #tpu.pipeline_mode<synchronous>, transform_indices = @transform_3, window_bounds = array<i64: 1, 128>}, {transform_indices = @transform_4, window_bounds = array<i64: 8, 128>}]} {
    %c0_i32 = arith.constant 0 : i32
    %0 = arith.cmpi eq, %arg1, %c0_i32 : i32
    %1 = arith.extui %0 : i1 to i32
    %c0_i32_0 = arith.constant 0 : i32
    %2 = arith.cmpi ne, %1, %c0_i32_0 : i32
    scf.if %2 {
      %cst = arith.constant 0.000000e+00 : f32
      %8 = vector.broadcast %cst : f32 to vector<8x128xf32>
      %c0 = arith.constant 0 : index
      %c0_2 = arith.constant 0 : index
      %9 = vector.load %arg8[%c0, %c0_2] : memref<8x128xf32, #tpu.memory_space<vmem>>, vector<8x128xf32>
      tpu.vector_store %arg8[%c0, %c0_2], %8 {strides = array<i32>} : memref<8x128xf32, #tpu.memory_space<vmem>>, vector<8x128xf32>,
      %cst_3 = arith.constant 0.000000e+00 : f32
      %10 = vector.broadcast %cst_3 : f32 to vector<8x128xf32>
      %c0_4 = arith.constant 0 : index
      %c0_5 = arith.constant 0 : index
      %11 = vector.load %arg7[%c0_4, %c0_5] : memref<8x128xf32, #tpu.memory_space<vmem>>, vector<8x128xf32>
      tpu.vector_store %arg7[%c0_4, %c0_5], %10 {strides = array<i32>} : memref<8x128xf32, #tpu.memory_space<vmem>>, vector<8x128xf32>,
    } else {
    }
    %3 = arith.index_cast %arg0 : i32 to index
    %4 = memref.load %arg2[%3] : memref<1xi32, #tpu.memory_space<smem>>
    %5 = arith.cmpi slt, %arg1, %4 : i32
    %6 = arith.extui %5 : i1 to i32
    %c0_i32_1 = arith.constant 0 : i32
    %7 = arith.cmpi ne, %6, %c0_i32_1 : i32
    scf.if %7 {
      %c0 = arith.constant 0 : index
      %c0_2 = arith.constant 0 : index
      %8 = vector.load %arg5[%c0, %c0_2] : memref<128x384xf32, #tpu.memory_space<vmem>>, vector<128x384xf32>
      %9 = vector.extract_strided_slice %8 {offsets = [0, 0], sizes = [128, 256], strides = [1, 1]} : vector<128x384xf32> to vector<128x256xf32>
      %10 = vector.extract_strided_slice %8 {offsets = [0, 256], sizes = [128, 128], strides = [1, 1]} : vector<128x384xf32> to vector<128x128xf32>
      %c0_3 = arith.constant 0 : index
      %c0_4 = arith.constant 0 : index
      %11 = vector.load %arg6[%c0_3, %c0_4] : memref<1x128xf32, #tpu.memory_space<vmem>>, vector<1x128xf32>
      %c0_5 = arith.constant 0 : index
      %c0_6 = arith.constant 0 : index
      %12 = vector.load %arg4[%c0_5, %c0_6] : memref<8x1xi32, #tpu.memory_space<vmem>>, vector<8x1xi32>
      %c8_i32 = arith.constant 8 : i32
      %13 = arith.muli %arg1, %c8_i32 : i32
      %c0_7 = arith.constant 0 : index
      %c0_8 = arith.constant 0 : index
      %14 = vector.load %arg8[%c0_7, %c0_8] : memref<8x128xf32, #tpu.memory_space<vmem>>, vector<8x128xf32>
      %c0_9 = arith.constant 0 : index
      %c0_10 = arith.constant 0 : index
      %15 = vector.load %arg7[%c0_9, %c0_10] : memref<8x128xf32, #tpu.memory_space<vmem>>, vector<8x128xf32>
      %c0_i32_11 = arith.constant 0 : i32
      %16 = arith.index_cast %c0_i32_11 : i32 to index
      %c0_12 = arith.constant 0 : index
      %c0_13 = arith.constant 0 : index
      %17 = vector.load %arg3[%16, %c0_12, %c0_13] : memref<8x8x384xf32, #tpu.memory_space<vmem>>, vector<1x8x384xf32>
      %18 = vector.shape_cast %17 : vector<1x8x384xf32> to vector<8x384xf32>
      %cst = arith.constant dense<0.000000e+00> : vector<8x256xf32>
      %19 = tpu.matmul %14, %9, %cst {dimension_numbers = #tpu.dot_dimension_numbers<[1], [0], [0], [1], [0, 0, 1, 1], [], []>} : vector<8x128xf32>, vector<128x256xf32>, vector<8x256xf32> -> vector<8x256xf32>
      %cst_14 = arith.constant dense<0.000000e+00> : vector<8x128xf32>
      %20 = tpu.matmul %14, %10, %cst_14 {dimension_numbers = #tpu.dot_dimension_numbers<[1], [0], [0], [1], [0, 0, 1, 1], [], []>} : vector<8x128xf32>, vector<128x128xf32>, vector<8x128xf32> -> vector<8x128xf32>
      %21 = vector.extract_strided_slice %18 {offsets = [0, 0], sizes = [8, 128], strides = [1, 1]} : vector<8x384xf32> to vector<8x128xf32>
      %22 = vector.extract_strided_slice %19 {offsets = [0, 0], sizes = [8, 128], strides = [1, 1]} : vector<8x256xf32> to vector<8x128xf32>
      %23 = arith.addf %21, %22 : vector<8x128xf32>
      %24 = arith.negf %23 : vector<8x128xf32>
      %25 = math.exp %24 : vector<8x128xf32>
      %cst_15 = arith.constant 1.000000e+00 : f32
      %26 = vector.broadcast %cst_15 : f32 to vector<8x128xf32>
      %27 = arith.addf %26, %25 : vector<8x128xf32>
      %28 = arith.divf %26, %27 : vector<8x128xf32>
      %29 = vector.extract_strided_slice %18 {offsets = [0, 128], sizes = [8, 128], strides = [1, 1]} : vector<8x384xf32> to vector<8x128xf32>
      %30 = vector.extract_strided_slice %19 {offsets = [0, 128], sizes = [8, 128], strides = [1, 1]} : vector<8x256xf32> to vector<8x128xf32>
      %31 = arith.addf %29, %30 : vector<8x128xf32>
      %32 = arith.negf %31 : vector<8x128xf32>
      %33 = math.exp %32 : vector<8x128xf32>
      %cst_16 = arith.constant 1.000000e+00 : f32
      %34 = vector.broadcast %cst_16 : f32 to vector<8x128xf32>
      %35 = arith.addf %34, %33 : vector<8x128xf32>
      %36 = arith.divf %34, %35 : vector<8x128xf32>
      %37 = vector.extract_strided_slice %18 {offsets = [0, 256], sizes = [8, 128], strides = [1, 1]} : vector<8x384xf32> to vector<8x128xf32>
      %38 = vector.broadcast %11 : vector<1x128xf32> to vector<8x128xf32>
      %39 = arith.addf %20, %38 : vector<8x128xf32>
      %40 = arith.mulf %28, %39 : vector<8x128xf32>
      %41 = arith.addf %37, %40 : vector<8x128xf32>
      %42 = math.tanh %41 : vector<8x128xf32>
      %cst_17 = arith.constant 1.000000e+00 : f32
      %43 = vector.broadcast %cst_17 : f32 to vector<8x128xf32>
      %44 = arith.subf %43, %36 : vector<8x128xf32>
      %45 = arith.mulf %44, %42 : vector<8x128xf32>
      %46 = arith.mulf %36, %14 : vector<8x128xf32>
      %47 = arith.addf %45, %46 : vector<8x128xf32>
      %48 = arith.addi %13, %c0_i32_11 : i32
      %c1_i32 = arith.constant 1 : i32
      %49 = arith.addi %48, %c1_i32 : i32
      %50 = vector.broadcast %49 : i32 to vector<8x1xi32>
      %51 = arith.cmpi eq, %12, %50 : vector<8x1xi32>
      %52 = vector.shape_cast %51 : vector<8x1xi1> to vector<8x1xi1>
      %53 = vector.broadcast %52 : vector<8x1xi1> to vector<8x128xi1>
      %54 = arith.select %53, %47, %15 : vector<8x128xi1>, vector<8x128xf32>
      %c1_i32_18 = arith.constant 1 : i32
      %55 = arith.index_cast %c1_i32_18 : i32 to index
      %c0_19 = arith.constant 0 : index
      %c0_20 = arith.constant 0 : index
      %56 = vector.load %arg3[%55, %c0_19, %c0_20] : memref<8x8x384xf32, #tpu.memory_space<vmem>>, vector<1x8x384xf32>
      %57 = vector.shape_cast %56 : vector<1x8x384xf32> to vector<8x384xf32>
      %cst_21 = arith.constant dense<0.000000e+00> : vector<8x256xf32>
      %58 = tpu.matmul %47, %9, %cst_21 {dimension_numbers = #tpu.dot_dimension_numbers<[1], [0], [0], [1], [0, 0, 1, 1], [], []>} : vector<8x128xf32>, vector<128x256xf32>, vector<8x256xf32> -> vector<8x256xf32>
      %cst_22 = arith.constant dense<0.000000e+00> : vector<8x128xf32>
      %59 = tpu.matmul %47, %10, %cst_22 {dimension_numbers = #tpu.dot_dimension_numbers<[1], [0], [0], [1], [0, 0, 1, 1], [], []>} : vector<8x128xf32>, vector<128x128xf32>, vector<8x128xf32> -> vector<8x128xf32>
      %60 = vector.extract_strided_slice %57 {offsets = [0, 0], sizes = [8, 128], strides = [1, 1]} : vector<8x384xf32> to vector<8x128xf32>
      %61 = vector.extract_strided_slice %58 {offsets = [0, 0], sizes = [8, 128], strides = [1, 1]} : vector<8x256xf32> to vector<8x128xf32>
      %62 = arith.addf %60, %61 : vector<8x128xf32>
      %63 = arith.negf %62 : vector<8x128xf32>
      %64 = math.exp %63 : vector<8x128xf32>
      %cst_23 = arith.constant 1.000000e+00 : f32
      %65 = vector.broadcast %cst_23 : f32 to vector<8x128xf32>
      %66 = arith.addf %65, %64 : vector<8x128xf32>
      %67 = arith.divf %65, %66 : vector<8x128xf32>
      %68 = vector.extract_strided_slice %57 {offsets = [0, 128], sizes = [8, 128], strides = [1, 1]} : vector<8x384xf32> to vector<8x128xf32>
      %69 = vector.extract_strided_slice %58 {offsets = [0, 128], sizes = [8, 128], strides = [1, 1]} : vector<8x256xf32> to vector<8x128xf32>
      %70 = arith.addf %68, %69 : vector<8x128xf32>
      %71 = arith.negf %70 : vector<8x128xf32>
      %72 = math.exp %71 : vector<8x128xf32>
      %cst_24 = arith.constant 1.000000e+00 : f32
      %73 = vector.broadcast %cst_24 : f32 to vector<8x128xf32>
      %74 = arith.addf %73, %72 : vector<8x128xf32>
      %75 = arith.divf %73, %74 : vector<8x128xf32>
      %76 = vector.extract_strided_slice %57 {offsets = [0, 256], sizes = [8, 128], strides = [1, 1]} : vector<8x384xf32> to vector<8x128xf32>
      %77 = vector.broadcast %11 : vector<1x128xf32> to vector<8x128xf32>
      %78 = arith.addf %59, %77 : vector<8x128xf32>
      %79 = arith.mulf %67, %78 : vector<8x128xf32>
      %80 = arith.addf %76, %79 : vector<8x128xf32>
      %81 = math.tanh %80 : vector<8x128xf32>
      %cst_25 = arith.constant 1.000000e+00 : f32
      %82 = vector.broadcast %cst_25 : f32 to vector<8x128xf32>
      %83 = arith.subf %82, %75 : vector<8x128xf32>
      %84 = arith.mulf %83, %81 : vector<8x128xf32>
      %85 = arith.mulf %75, %47 : vector<8x128xf32>
      %86 = arith.addf %84, %85 : vector<8x128xf32>
      %87 = arith.addi %13, %c1_i32_18 : i32
      %c1_i32_26 = arith.constant 1 : i32
      %88 = arith.addi %87, %c1_i32_26 : i32
      %89 = vector.broadcast %88 : i32 to vector<8x1xi32>
      %90 = arith.cmpi eq, %12, %89 : vector<8x1xi32>
      %91 = vector.shape_cast %90 : vector<8x1xi1> to vector<8x1xi1>
      %92 = vector.broadcast %91 : vector<8x1xi1> to vector<8x128xi1>
      %93 = arith.select %92, %86, %54 : vector<8x128xi1>, vector<8x128xf32>
      %c2_i32 = arith.constant 2 : i32
      %94 = arith.index_cast %c2_i32 : i32 to index
      %c0_27 = arith.constant 0 : index
      %c0_28 = arith.constant 0 : index
      %95 = vector.load %arg3[%94, %c0_27, %c0_28] : memref<8x8x384xf32, #tpu.memory_space<vmem>>, vector<1x8x384xf32>
      %96 = vector.shape_cast %95 : vector<1x8x384xf32> to vector<8x384xf32>
      %cst_29 = arith.constant dense<0.000000e+00> : vector<8x256xf32>
      %97 = tpu.matmul %86, %9, %cst_29 {dimension_numbers = #tpu.dot_dimension_numbers<[1], [0], [0], [1], [0, 0, 1, 1], [], []>} : vector<8x128xf32>, vector<128x256xf32>, vector<8x256xf32> -> vector<8x256xf32>
      %cst_30 = arith.constant dense<0.000000e+00> : vector<8x128xf32>
      %98 = tpu.matmul %86, %10, %cst_30 {dimension_numbers = #tpu.dot_dimension_numbers<[1], [0], [0], [1], [0, 0, 1, 1], [], []>} : vector<8x128xf32>, vector<128x128xf32>, vector<8x128xf32> -> vector<8x128xf32>
      %99 = vector.extract_strided_slice %96 {offsets = [0, 0], sizes = [8, 128], strides = [1, 1]} : vector<8x384xf32> to vector<8x128xf32>
      %100 = vector.extract_strided_slice %97 {offsets = [0, 0], sizes = [8, 128], strides = [1, 1]} : vector<8x256xf32> to vector<8x128xf32>
      %101 = arith.addf %99, %100 : vector<8x128xf32>
      %102 = arith.negf %101 : vector<8x128xf32>
      %103 = math.exp %102 : vector<8x128xf32>
      %cst_31 = arith.constant 1.000000e+00 : f32
      %104 = vector.broadcast %cst_31 : f32 to vector<8x128xf32>
      %105 = arith.addf %104, %103 : vector<8x128xf32>
      %106 = arith.divf %104, %105 : vector<8x128xf32>
      %107 = vector.extract_strided_slice %96 {offsets = [0, 128], sizes = [8, 128], strides = [1, 1]} : vector<8x384xf32> to vector<8x128xf32>
      %108 = vector.extract_strided_slice %97 {offsets = [0, 128], sizes = [8, 128], strides = [1, 1]} : vector<8x256xf32> to vector<8x128xf32>
      %109 = arith.addf %107, %108 : vector<8x128xf32>
      %110 = arith.negf %109 : vector<8x128xf32>
      %111 = math.exp %110 : vector<8x128xf32>
      %cst_32 = arith.constant 1.000000e+00 : f32
      %112 = vector.broadcast %cst_32 : f32 to vector<8x128xf32>
      %113 = arith.addf %112, %111 : vector<8x128xf32>
      %114 = arith.divf %112, %113 : vector<8x128xf32>
      %115 = vector.extract_strided_slice %96 {offsets = [0, 256], sizes = [8, 128], strides = [1, 1]} : vector<8x384xf32> to vector<8x128xf32>
      %116 = vector.broadcast %11 : vector<1x128xf32> to vector<8x128xf32>
      %117 = arith.addf %98, %116 : vector<8x128xf32>
      %118 = arith.mulf %106, %117 : vector<8x128xf32>
      %119 = arith.addf %115, %118 : vector<8x128xf32>
      %120 = math.tanh %119 : vector<8x128xf32>
      %cst_33 = arith.constant 1.000000e+00 : f32
      %121 = vector.broadcast %cst_33 : f32 to vector<8x128xf32>
      %122 = arith.subf %121, %114 : vector<8x128xf32>
      %123 = arith.mulf %122, %120 : vector<8x128xf32>
      %124 = arith.mulf %114, %86 : vector<8x128xf32>
      %125 = arith.addf %123, %124 : vector<8x128xf32>
      %126 = arith.addi %13, %c2_i32 : i32
      %c1_i32_34 = arith.constant 1 : i32
      %127 = arith.addi %126, %c1_i32_34 : i32
      %128 = vector.broadcast %127 : i32 to vector<8x1xi32>
      %129 = arith.cmpi eq, %12, %128 : vector<8x1xi32>
      %130 = vector.shape_cast %129 : vector<8x1xi1> to vector<8x1xi1>
      %131 = vector.broadcast %130 : vector<8x1xi1> to vector<8x128xi1>
      %132 = arith.select %131, %125, %93 : vector<8x128xi1>, vector<8x128xf32>
      %c3_i32 = arith.constant 3 : i32
      %133 = arith.index_cast %c3_i32 : i32 to index
      %c0_35 = arith.constant 0 : index
      %c0_36 = arith.constant 0 : index
      %134 = vector.load %arg3[%133, %c0_35, %c0_36] : memref<8x8x384xf32, #tpu.memory_space<vmem>>, vector<1x8x384xf32>
      %135 = vector.shape_cast %134 : vector<1x8x384xf32> to vector<8x384xf32>
      %cst_37 = arith.constant dense<0.000000e+00> : vector<8x256xf32>
      %136 = tpu.matmul %125, %9, %cst_37 {dimension_numbers = #tpu.dot_dimension_numbers<[1], [0], [0], [1], [0, 0, 1, 1], [], []>} : vector<8x128xf32>, vector<128x256xf32>, vector<8x256xf32> -> vector<8x256xf32>
      %cst_38 = arith.constant dense<0.000000e+00> : vector<8x128xf32>
      %137 = tpu.matmul %125, %10, %cst_38 {dimension_numbers = #tpu.dot_dimension_numbers<[1], [0], [0], [1], [0, 0, 1, 1], [], []>} : vector<8x128xf32>, vector<128x128xf32>, vector<8x128xf32> -> vector<8x128xf32>
      %138 = vector.extract_strided_slice %135 {offsets = [0, 0], sizes = [8, 128], strides = [1, 1]} : vector<8x384xf32> to vector<8x128xf32>
      %139 = vector.extract_strided_slice %136 {offsets = [0, 0], sizes = [8, 128], strides = [1, 1]} : vector<8x256xf32> to vector<8x128xf32>
      %140 = arith.addf %138, %139 : vector<8x128xf32>
      %141 = arith.negf %140 : vector<8x128xf32>
      %142 = math.exp %141 : vector<8x128xf32>
      %cst_39 = arith.constant 1.000000e+00 : f32
      %143 = vector.broadcast %cst_39 : f32 to vector<8x128xf32>
      %144 = arith.addf %143, %142 : vector<8x128xf32>
      %145 = arith.divf %143, %144 : vector<8x128xf32>
      %146 = vector.extract_strided_slice %135 {offsets = [0, 128], sizes = [8, 128], strides = [1, 1]} : vector<8x384xf32> to vector<8x128xf32>
      %147 = vector.extract_strided_slice %136 {offsets = [0, 128], sizes = [8, 128], strides = [1, 1]} : vector<8x256xf32> to vector<8x128xf32>
      %148 = arith.addf %146, %147 : vector<8x128xf32>
      %149 = arith.negf %148 : vector<8x128xf32>
      %150 = math.exp %149 : vector<8x128xf32>
      %cst_40 = arith.constant 1.000000e+00 : f32
      %151 = vector.broadcast %cst_40 : f32 to vector<8x128xf32>
      %152 = arith.addf %151, %150 : vector<8x128xf32>
      %153 = arith.divf %151, %152 : vector<8x128xf32>
      %154 = vector.extract_strided_slice %135 {offsets = [0, 256], sizes = [8, 128], strides = [1, 1]} : vector<8x384xf32> to vector<8x128xf32>
      %155 = vector.broadcast %11 : vector<1x128xf32> to vector<8x128xf32>
      %156 = arith.addf %137, %155 : vector<8x128xf32>
      %157 = arith.mulf %145, %156 : vector<8x128xf32>
      %158 = arith.addf %154, %157 : vector<8x128xf32>
      %159 = math.tanh %158 : vector<8x128xf32>
      %cst_41 = arith.constant 1.000000e+00 : f32
      %160 = vector.broadcast %cst_41 : f32 to vector<8x128xf32>
      %161 = arith.subf %160, %153 : vector<8x128xf32>
      %162 = arith.mulf %161, %159 : vector<8x128xf32>
      %163 = arith.mulf %153, %125 : vector<8x128xf32>
      %164 = arith.addf %162, %163 : vector<8x128xf32>
      %165 = arith.addi %13, %c3_i32 : i32
      %c1_i32_42 = arith.constant 1 : i32
      %166 = arith.addi %165, %c1_i32_42 : i32
      %167 = vector.broadcast %166 : i32 to vector<8x1xi32>
      %168 = arith.cmpi eq, %12, %167 : vector<8x1xi32>
      %169 = vector.shape_cast %168 : vector<8x1xi1> to vector<8x1xi1>
      %170 = vector.broadcast %169 : vector<8x1xi1> to vector<8x128xi1>
      %171 = arith.select %170, %164, %132 : vector<8x128xi1>, vector<8x128xf32>
      %c4_i32 = arith.constant 4 : i32
      %172 = arith.index_cast %c4_i32 : i32 to index
      %c0_43 = arith.constant 0 : index
      %c0_44 = arith.constant 0 : index
      %173 = vector.load %arg3[%172, %c0_43, %c0_44] : memref<8x8x384xf32, #tpu.memory_space<vmem>>, vector<1x8x384xf32>
      %174 = vector.shape_cast %173 : vector<1x8x384xf32> to vector<8x384xf32>
      %cst_45 = arith.constant dense<0.000000e+00> : vector<8x256xf32>
      %175 = tpu.matmul %164, %9, %cst_45 {dimension_numbers = #tpu.dot_dimension_numbers<[1], [0], [0], [1], [0, 0, 1, 1], [], []>} : vector<8x128xf32>, vector<128x256xf32>, vector<8x256xf32> -> vector<8x256xf32>
      %cst_46 = arith.constant dense<0.000000e+00> : vector<8x128xf32>
      %176 = tpu.matmul %164, %10, %cst_46 {dimension_numbers = #tpu.dot_dimension_numbers<[1], [0], [0], [1], [0, 0, 1, 1], [], []>} : vector<8x128xf32>, vector<128x128xf32>, vector<8x128xf32> -> vector<8x128xf32>
      %177 = vector.extract_strided_slice %174 {offsets = [0, 0], sizes = [8, 128], strides = [1, 1]} : vector<8x384xf32> to vector<8x128xf32>
      %178 = vector.extract_strided_slice %175 {offsets = [0, 0], sizes = [8, 128], strides = [1, 1]} : vector<8x256xf32> to vector<8x128xf32>
      %179 = arith.addf %177, %178 : vector<8x128xf32>
      %180 = arith.negf %179 : vector<8x128xf32>
      %181 = math.exp %180 : vector<8x128xf32>
      %cst_47 = arith.constant 1.000000e+00 : f32
      %182 = vector.broadcast %cst_47 : f32 to vector<8x128xf32>
      %183 = arith.addf %182, %181 : vector<8x128xf32>
      %184 = arith.divf %182, %183 : vector<8x128xf32>
      %185 = vector.extract_strided_slice %174 {offsets = [0, 128], sizes = [8, 128], strides = [1, 1]} : vector<8x384xf32> to vector<8x128xf32>
      %186 = vector.extract_strided_slice %175 {offsets = [0, 128], sizes = [8, 128], strides = [1, 1]} : vector<8x256xf32> to vector<8x128xf32>
      %187 = arith.addf %185, %186 : vector<8x128xf32>
      %188 = arith.negf %187 : vector<8x128xf32>
      %189 = math.exp %188 : vector<8x128xf32>
      %cst_48 = arith.constant 1.000000e+00 : f32
      %190 = vector.broadcast %cst_48 : f32 to vector<8x128xf32>
      %191 = arith.addf %190, %189 : vector<8x128xf32>
      %192 = arith.divf %190, %191 : vector<8x128xf32>
      %193 = vector.extract_strided_slice %174 {offsets = [0, 256], sizes = [8, 128], strides = [1, 1]} : vector<8x384xf32> to vector<8x128xf32>
      %194 = vector.broadcast %11 : vector<1x128xf32> to vector<8x128xf32>
      %195 = arith.addf %176, %194 : vector<8x128xf32>
      %196 = arith.mulf %184, %195 : vector<8x128xf32>
      %197 = arith.addf %193, %196 : vector<8x128xf32>
      %198 = math.tanh %197 : vector<8x128xf32>
      %cst_49 = arith.constant 1.000000e+00 : f32
      %199 = vector.broadcast %cst_49 : f32 to vector<8x128xf32>
      %200 = arith.subf %199, %192 : vector<8x128xf32>
      %201 = arith.mulf %200, %198 : vector<8x128xf32>
      %202 = arith.mulf %192, %164 : vector<8x128xf32>
      %203 = arith.addf %201, %202 : vector<8x128xf32>
      %204 = arith.addi %13, %c4_i32 : i32
      %c1_i32_50 = arith.constant 1 : i32
      %205 = arith.addi %204, %c1_i32_50 : i32
      %206 = vector.broadcast %205 : i32 to vector<8x1xi32>
      %207 = arith.cmpi eq, %12, %206 : vector<8x1xi32>
      %208 = vector.shape_cast %207 : vector<8x1xi1> to vector<8x1xi1>
      %209 = vector.broadcast %208 : vector<8x1xi1> to vector<8x128xi1>
      %210 = arith.select %209, %203, %171 : vector<8x128xi1>, vector<8x128xf32>
      %c5_i32 = arith.constant 5 : i32
      %211 = arith.index_cast %c5_i32 : i32 to index
      %c0_51 = arith.constant 0 : index
      %c0_52 = arith.constant 0 : index
      %212 = vector.load %arg3[%211, %c0_51, %c0_52] : memref<8x8x384xf32, #tpu.memory_space<vmem>>, vector<1x8x384xf32>
      %213 = vector.shape_cast %212 : vector<1x8x384xf32> to vector<8x384xf32>
      %cst_53 = arith.constant dense<0.000000e+00> : vector<8x256xf32>
      %214 = tpu.matmul %203, %9, %cst_53 {dimension_numbers = #tpu.dot_dimension_numbers<[1], [0], [0], [1], [0, 0, 1, 1], [], []>} : vector<8x128xf32>, vector<128x256xf32>, vector<8x256xf32> -> vector<8x256xf32>
      %cst_54 = arith.constant dense<0.000000e+00> : vector<8x128xf32>
      %215 = tpu.matmul %203, %10, %cst_54 {dimension_numbers = #tpu.dot_dimension_numbers<[1], [0], [0], [1], [0, 0, 1, 1], [], []>} : vector<8x128xf32>, vector<128x128xf32>, vector<8x128xf32> -> vector<8x128xf32>
      %216 = vector.extract_strided_slice %213 {offsets = [0, 0], sizes = [8, 128], strides = [1, 1]} : vector<8x384xf32> to vector<8x128xf32>
      %217 = vector.extract_strided_slice %214 {offsets = [0, 0], sizes = [8, 128], strides = [1, 1]} : vector<8x256xf32> to vector<8x128xf32>
      %218 = arith.addf %216, %217 : vector<8x128xf32>
      %219 = arith.negf %218 : vector<8x128xf32>
      %220 = math.exp %219 : vector<8x128xf32>
      %cst_55 = arith.constant 1.000000e+00 : f32
      %221 = vector.broadcast %cst_55 : f32 to vector<8x128xf32>
      %222 = arith.addf %221, %220 : vector<8x128xf32>
      %223 = arith.divf %221, %222 : vector<8x128xf32>
      %224 = vector.extract_strided_slice %213 {offsets = [0, 128], sizes = [8, 128], strides = [1, 1]} : vector<8x384xf32> to vector<8x128xf32>
      %225 = vector.extract_strided_slice %214 {offsets = [0, 128], sizes = [8, 128], strides = [1, 1]} : vector<8x256xf32> to vector<8x128xf32>
      %226 = arith.addf %224, %225 : vector<8x128xf32>
      %227 = arith.negf %226 : vector<8x128xf32>
      %228 = math.exp %227 : vector<8x128xf32>
      %cst_56 = arith.constant 1.000000e+00 : f32
      %229 = vector.broadcast %cst_56 : f32 to vector<8x128xf32>
      %230 = arith.addf %229, %228 : vector<8x128xf32>
      %231 = arith.divf %229, %230 : vector<8x128xf32>
      %232 = vector.extract_strided_slice %213 {offsets = [0, 256], sizes = [8, 128], strides = [1, 1]} : vector<8x384xf32> to vector<8x128xf32>
      %233 = vector.broadcast %11 : vector<1x128xf32> to vector<8x128xf32>
      %234 = arith.addf %215, %233 : vector<8x128xf32>
      %235 = arith.mulf %223, %234 : vector<8x128xf32>
      %236 = arith.addf %232, %235 : vector<8x128xf32>
      %237 = math.tanh %236 : vector<8x128xf32>
      %cst_57 = arith.constant 1.000000e+00 : f32
      %238 = vector.broadcast %cst_57 : f32 to vector<8x128xf32>
      %239 = arith.subf %238, %231 : vector<8x128xf32>
      %240 = arith.mulf %239, %237 : vector<8x128xf32>
      %241 = arith.mulf %231, %203 : vector<8x128xf32>
      %242 = arith.addf %240, %241 : vector<8x128xf32>
      %243 = arith.addi %13, %c5_i32 : i32
      %c1_i32_58 = arith.constant 1 : i32
      %244 = arith.addi %243, %c1_i32_58 : i32
      %245 = vector.broadcast %244 : i32 to vector<8x1xi32>
      %246 = arith.cmpi eq, %12, %245 : vector<8x1xi32>
      %247 = vector.shape_cast %246 : vector<8x1xi1> to vector<8x1xi1>
      %248 = vector.broadcast %247 : vector<8x1xi1> to vector<8x128xi1>
      %249 = arith.select %248, %242, %210 : vector<8x128xi1>, vector<8x128xf32>
      %c6_i32 = arith.constant 6 : i32
      %250 = arith.index_cast %c6_i32 : i32 to index
      %c0_59 = arith.constant 0 : index
      %c0_60 = arith.constant 0 : index
      %251 = vector.load %arg3[%250, %c0_59, %c0_60] : memref<8x8x384xf32, #tpu.memory_space<vmem>>, vector<1x8x384xf32>
      %252 = vector.shape_cast %251 : vector<1x8x384xf32> to vector<8x384xf32>
      %cst_61 = arith.constant dense<0.000000e+00> : vector<8x256xf32>
      %253 = tpu.matmul %242, %9, %cst_61 {dimension_numbers = #tpu.dot_dimension_numbers<[1], [0], [0], [1], [0, 0, 1, 1], [], []>} : vector<8x128xf32>, vector<128x256xf32>, vector<8x256xf32> -> vector<8x256xf32>
      %cst_62 = arith.constant dense<0.000000e+00> : vector<8x128xf32>
      %254 = tpu.matmul %242, %10, %cst_62 {dimension_numbers = #tpu.dot_dimension_numbers<[1], [0], [0], [1], [0, 0, 1, 1], [], []>} : vector<8x128xf32>, vector<128x128xf32>, vector<8x128xf32> -> vector<8x128xf32>
      %255 = vector.extract_strided_slice %252 {offsets = [0, 0], sizes = [8, 128], strides = [1, 1]} : vector<8x384xf32> to vector<8x128xf32>
      %256 = vector.extract_strided_slice %253 {offsets = [0, 0], sizes = [8, 128], strides = [1, 1]} : vector<8x256xf32> to vector<8x128xf32>
      %257 = arith.addf %255, %256 : vector<8x128xf32>
      %258 = arith.negf %257 : vector<8x128xf32>
      %259 = math.exp %258 : vector<8x128xf32>
      %cst_63 = arith.constant 1.000000e+00 : f32
      %260 = vector.broadcast %cst_63 : f32 to vector<8x128xf32>
      %261 = arith.addf %260, %259 : vector<8x128xf32>
      %262 = arith.divf %260, %261 : vector<8x128xf32>
      %263 = vector.extract_strided_slice %252 {offsets = [0, 128], sizes = [8, 128], strides = [1, 1]} : vector<8x384xf32> to vector<8x128xf32>
      %264 = vector.extract_strided_slice %253 {offsets = [0, 128], sizes = [8, 128], strides = [1, 1]} : vector<8x256xf32> to vector<8x128xf32>
      %265 = arith.addf %263, %264 : vector<8x128xf32>
      %266 = arith.negf %265 : vector<8x128xf32>
      %267 = math.exp %266 : vector<8x128xf32>
      %cst_64 = arith.constant 1.000000e+00 : f32
      %268 = vector.broadcast %cst_64 : f32 to vector<8x128xf32>
      %269 = arith.addf %268, %267 : vector<8x128xf32>
      %270 = arith.divf %268, %269 : vector<8x128xf32>
      %271 = vector.extract_strided_slice %252 {offsets = [0, 256], sizes = [8, 128], strides = [1, 1]} : vector<8x384xf32> to vector<8x128xf32>
      %272 = vector.broadcast %11 : vector<1x128xf32> to vector<8x128xf32>
      %273 = arith.addf %254, %272 : vector<8x128xf32>
      %274 = arith.mulf %262, %273 : vector<8x128xf32>
      %275 = arith.addf %271, %274 : vector<8x128xf32>
      %276 = math.tanh %275 : vector<8x128xf32>
      %cst_65 = arith.constant 1.000000e+00 : f32
      %277 = vector.broadcast %cst_65 : f32 to vector<8x128xf32>
      %278 = arith.subf %277, %270 : vector<8x128xf32>
      %279 = arith.mulf %278, %276 : vector<8x128xf32>
      %280 = arith.mulf %270, %242 : vector<8x128xf32>
      %281 = arith.addf %279, %280 : vector<8x128xf32>
      %282 = arith.addi %13, %c6_i32 : i32
      %c1_i32_66 = arith.constant 1 : i32
      %283 = arith.addi %282, %c1_i32_66 : i32
      %284 = vector.broadcast %283 : i32 to vector<8x1xi32>
      %285 = arith.cmpi eq, %12, %284 : vector<8x1xi32>
      %286 = vector.shape_cast %285 : vector<8x1xi1> to vector<8x1xi1>
      %287 = vector.broadcast %286 : vector<8x1xi1> to vector<8x128xi1>
      %288 = arith.select %287, %281, %249 : vector<8x128xi1>, vector<8x128xf32>
      %c7_i32 = arith.constant 7 : i32
      %289 = arith.index_cast %c7_i32 : i32 to index
      %c0_67 = arith.constant 0 : index
      %c0_68 = arith.constant 0 : index
      %290 = vector.load %arg3[%289, %c0_67, %c0_68] : memref<8x8x384xf32, #tpu.memory_space<vmem>>, vector<1x8x384xf32>
      %291 = vector.shape_cast %290 : vector<1x8x384xf32> to vector<8x384xf32>
      %cst_69 = arith.constant dense<0.000000e+00> : vector<8x256xf32>
      %292 = tpu.matmul %281, %9, %cst_69 {dimension_numbers = #tpu.dot_dimension_numbers<[1], [0], [0], [1], [0, 0, 1, 1], [], []>} : vector<8x128xf32>, vector<128x256xf32>, vector<8x256xf32> -> vector<8x256xf32>
      %cst_70 = arith.constant dense<0.000000e+00> : vector<8x128xf32>
      %293 = tpu.matmul %281, %10, %cst_70 {dimension_numbers = #tpu.dot_dimension_numbers<[1], [0], [0], [1], [0, 0, 1, 1], [], []>} : vector<8x128xf32>, vector<128x128xf32>, vector<8x128xf32> -> vector<8x128xf32>
      %294 = vector.extract_strided_slice %291 {offsets = [0, 0], sizes = [8, 128], strides = [1, 1]} : vector<8x384xf32> to vector<8x128xf32>
      %295 = vector.extract_strided_slice %292 {offsets = [0, 0], sizes = [8, 128], strides = [1, 1]} : vector<8x256xf32> to vector<8x128xf32>
      %296 = arith.addf %294, %295 : vector<8x128xf32>
      %297 = arith.negf %296 : vector<8x128xf32>
      %298 = math.exp %297 : vector<8x128xf32>
      %cst_71 = arith.constant 1.000000e+00 : f32
      %299 = vector.broadcast %cst_71 : f32 to vector<8x128xf32>
      %300 = arith.addf %299, %298 : vector<8x128xf32>
      %301 = arith.divf %299, %300 : vector<8x128xf32>
      %302 = vector.extract_strided_slice %291 {offsets = [0, 128], sizes = [8, 128], strides = [1, 1]} : vector<8x384xf32> to vector<8x128xf32>
      %303 = vector.extract_strided_slice %292 {offsets = [0, 128], sizes = [8, 128], strides = [1, 1]} : vector<8x256xf32> to vector<8x128xf32>
      %304 = arith.addf %302, %303 : vector<8x128xf32>
      %305 = arith.negf %304 : vector<8x128xf32>
      %306 = math.exp %305 : vector<8x128xf32>
      %cst_72 = arith.constant 1.000000e+00 : f32
      %307 = vector.broadcast %cst_72 : f32 to vector<8x128xf32>
      %308 = arith.addf %307, %306 : vector<8x128xf32>
      %309 = arith.divf %307, %308 : vector<8x128xf32>
      %310 = vector.extract_strided_slice %291 {offsets = [0, 256], sizes = [8, 128], strides = [1, 1]} : vector<8x384xf32> to vector<8x128xf32>
      %311 = vector.broadcast %11 : vector<1x128xf32> to vector<8x128xf32>
      %312 = arith.addf %293, %311 : vector<8x128xf32>
      %313 = arith.mulf %301, %312 : vector<8x128xf32>
      %314 = arith.addf %310, %313 : vector<8x128xf32>
      %315 = math.tanh %314 : vector<8x128xf32>
      %cst_73 = arith.constant 1.000000e+00 : f32
      %316 = vector.broadcast %cst_73 : f32 to vector<8x128xf32>
      %317 = arith.subf %316, %309 : vector<8x128xf32>
      %318 = arith.mulf %317, %315 : vector<8x128xf32>
      %319 = arith.mulf %309, %281 : vector<8x128xf32>
      %320 = arith.addf %318, %319 : vector<8x128xf32>
      %321 = arith.addi %13, %c7_i32 : i32
      %c1_i32_74 = arith.constant 1 : i32
      %322 = arith.addi %321, %c1_i32_74 : i32
      %323 = vector.broadcast %322 : i32 to vector<8x1xi32>
      %324 = arith.cmpi eq, %12, %323 : vector<8x1xi32>
      %325 = vector.shape_cast %324 : vector<8x1xi1> to vector<8x1xi1>
      %326 = vector.broadcast %325 : vector<8x1xi1> to vector<8x128xi1>
      %327 = arith.select %326, %320, %288 : vector<8x128xi1>, vector<8x128xf32>
      %c8_i32_75 = arith.constant 8 : i32
      %c0_76 = arith.constant 0 : index
      %c0_77 = arith.constant 0 : index
      %328 = vector.load %arg8[%c0_76, %c0_77] : memref<8x128xf32, #tpu.memory_space<vmem>>, vector<8x128xf32>
      tpu.vector_store %arg8[%c0_76, %c0_77], %320 {strides = array<i32>} : memref<8x128xf32, #tpu.memory_space<vmem>>, vector<8x128xf32>,
      %c0_78 = arith.constant 0 : index
      %c0_79 = arith.constant 0 : index
      %329 = vector.load %arg7[%c0_78, %c0_79] : memref<8x128xf32, #tpu.memory_space<vmem>>, vector<8x128xf32>
      tpu.vector_store %arg7[%c0_78, %c0_79], %327 {strides = array<i32>} : memref<8x128xf32, #tpu.memory_space<vmem>>, vector<8x128xf32>,
    } else {
    }
    return
  }
  func.func @transform_0(%arg0: i32, %arg1: i32, %arg2: memref<1xi32, #tpu.memory_space<smem>>) -> (i32, i32, i32) {
    %0 = arith.index_cast %arg0 : i32 to index
    %1 = memref.load %arg2[%0] : memref<1xi32, #tpu.memory_space<smem>>
    %c1_i32 = arith.constant 1 : i32
    %2 = arith.subi %1, %c1_i32 : i32
    %3 = arith.minsi %arg1, %2 : i32
    %c0_i32 = arith.constant 0 : i32
    %c0_i32_0 = arith.constant 0 : i32
    return %3, %arg0, %c0_i32 : i32, i32, i32
  }
  func.func @transform_1(%arg0: i32, %arg1: i32, %arg2: memref<1xi32, #tpu.memory_space<smem>>) -> (i32, i32) {
    %c0_i32 = arith.constant 0 : i32
    %c0_i32_0 = arith.constant 0 : i32
    return %arg0, %c0_i32 : i32, i32
  }
  func.func @transform_2(%arg0: i32, %arg1: i32, %arg2: memref<1xi32, #tpu.memory_space<smem>>) -> (i32, i32) {
    %c0_i32 = arith.constant 0 : i32
    %c0_i32_0 = arith.constant 0 : i32
    %c0_i32_1 = arith.constant 0 : i32
    return %c0_i32, %c0_i32_0 : i32, i32
  }
  func.func @transform_3(%arg0: i32, %arg1: i32, %arg2: memref<1xi32, #tpu.memory_space<smem>>) -> (i32, i32) {
    %c0_i32 = arith.constant 0 : i32
    %c0_i32_0 = arith.constant 0 : i32
    %c0_i32_1 = arith.constant 0 : i32
    return %c0_i32, %c0_i32_0 : i32, i32
  }
  func.func @transform_4(%arg0: i32, %arg1: i32, %arg2: memref<1xi32, #tpu.memory_space<smem>>) -> (i32, i32) {
    %c0_i32 = arith.constant 0 : i32
    %c0_i32_0 = arith.constant 0 : i32
    return %arg0, %c0_i32 : i32, i32
  }
}

</mosaic_0001>

<llo_original>
// kernel: tpu_custom_call.1
$region0: #{tpu_custom_call.1}
  #allocation0 [shape = 'u32[]', space=smem, size = 0x4, offset = 0x4, fixed_abs, tag = 'smem constant byte address 0x4 - core index']
  #allocation1 [shape = 'u32[144,128]{1,0:T(1,128)}', space=vmem, size = 0x12000, scoped, tag = 'internal scratch']
  #allocation2 [shape = 'f32[8,128]{1,0:T(8,128)}', space=vmem, size = 0x1000, scoped, tag = 'scratch operand']
  #allocation3 [shape = 's32[1]{0}', space=sflag, size = 0x4, scoped, tag = 'scoped memory for tpu_custom_call.1']
  #allocation4 [shape = 's32[1]{0:T(128)S(6)}', space=smem, size = 0x200, scoped, tag = 'prefetched SMEM operand 0']
  %s0 = inlined_call_operand.<no memory space> [shape: s32[1], index: 0, kind: input, shape index: {}]
  %s1 = inlined_call_operand.hbm [shape: f32[8,8,384], index: 1, kind: input, shape index: {}]
  %s2 = inlined_call_operand.vmem [shape: s32[8,1], index: 2, kind: input, shape index: {}]
  %s3 = inlined_call_operand.hbm [shape: f32[128,384], index: 3, kind: input, shape index: {}]
  %s4 = inlined_call_operand.vmem [shape: f32[1,128], index: 4, kind: input, shape index: {}]
  %s5 = inlined_call_operand.hbm [shape: f32[8,128], index: 5, kind: output, shape index: {}]
  %s6 = sld [smem:[#allocation0]]
  $region42: #{tpu_custom_call.1} parent=0
    _
  %s8 = ssub.s32 1, %s6
  %s9 = scalar_select 0, %s8, %s6
  %10 = sst [smem:[#allocation4]] %s0
  $region1: #{tpu_custom_call.1} parent=0
    #allocation5 [shape = 'u8[98304]{0}', space=vmem, size = 0x18000, scoped, tag = 'input window, operand 1, single buffered']
    #allocation6 [shape = 's32[1]{0}', space=sflag, size = 0x4, scoped, tag = 'scoped memory for tpu_custom_call.1']
    #allocation7 [shape = 's32[1]{0}', space=sflag, size = 0x4, scoped, tag = 'scoped memory for tpu_custom_call.1']
    #allocation8 [shape = 'u8[196608]{0}', space=vmem, size = 0x30000, scoped, tag = 'input window, operand 3, single buffered']
    #allocation9 [shape = 's32[1]{0}', space=sflag, size = 0x4, scoped, tag = 'scoped memory for tpu_custom_call.1']
    #allocation10 [shape = 'u8[4096]{0}', space=vmem, size = 0x1000, scoped, tag = 'output window, operand 0, single buffered']
    %11 = vsyncpa [#allocation6], 0
    %12 = vsyncpa [#allocation9], 0
    %13 = vsyncpa [#allocation7], 0
    // Predicated region
    $region2: #{tpu_custom_call.1} parent=1 // pred_check
      _
    $region3: #{tpu_custom_call.1} parent=1 // pred_check_branch
      %15 = sbr.rel (0) target = $region5
    $region4: #{tpu_custom_call.1} parent=1 // pred_region
      %s16 = sld [smem:[#allocation4]]
      %s17 = ssub.s32 %s16, 1
      %p18 = scmp.lt.s32.totalorder 0, %s17
      %s19 = scalar_select %p18, 0, %s17
      %s20 = smul.u32 8, %s19
      %s22 = ssub.s32 3072, 3072
      %23 = vsyncadd [#allocation6], %s22
      %s24 = smul.addr %s20, 3
      %s25 = smul.addr %s24, 128
      %s26 = scalar_lea.hbm %s1, %s25
      %s27 = sshll.u32 [#allocation5], 4
      %s28 = int_to_ptr.vmem [resolvable:$true] %s27
      %33 = dma.hbm_to_vmem [thread:$0]  %s26, 3072, %s28, [#allocation6], 384, 384, 24
    $region5: #{tpu_custom_call.1} parent=1 // pred_fallthru
      _
    // Predicated region
    $region6: #{tpu_custom_call.1} parent=1 // pred_check
      _
    $region7: #{tpu_custom_call.1} parent=1 // pred_check_branch
      %35 = sbr.rel (0) target = $region9
    $region8: #{tpu_custom_call.1} parent=1 // pred_region
      _
    $region9: #{tpu_custom_call.1} parent=1 // pred_fallthru
      _
    // Predicated region
    $region10: #{tpu_custom_call.1} parent=1 // pred_check
      _
    $region11: #{tpu_custom_call.1} parent=1 // pred_check_branch
      %37 = sbr.rel (0) target = $region13
    $region12: #{tpu_custom_call.1} parent=1 // pred_region
      %s39 = ssub.s32 6144, 6144
      %40 = vsyncadd [#allocation9], %s39
      %s41 = sshll.u32 [#allocation8], 4
      %s42 = int_to_ptr.vmem [resolvable:$true] %s41
      %47 = dma.hbm_to_vmem [thread:$0]  %s3, 6144, %s42, [#allocation9], 384, 384, 24
    $region13: #{tpu_custom_call.1} parent=1 // pred_fallthru
      _
    // Predicated region
    $region14: #{tpu_custom_call.1} parent=1 // pred_check
      _
    $region15: #{tpu_custom_call.1} parent=1 // pred_check_branch
      %49 = sbr.rel (0) target = $region17
    $region16: #{tpu_custom_call.1} parent=1 // pred_region
      _
    $region17: #{tpu_custom_call.1} parent=1 // pred_fallthru
      _
    // Predicated region
    $region18: #{tpu_custom_call.1} parent=1 // pred_check
      _
    $region19: #{tpu_custom_call.1} parent=1 // pred_check_branch
      %51 = sbr.rel (0) target = $region21
    $region20: #{tpu_custom_call.1} parent=1 // pred_region
      %52 = dma.done [#allocation6], 3072
    $region21: #{tpu_custom_call.1} parent=1 // pred_fallthru
      _
    // Predicated region
    $region22: #{tpu_custom_call.1} parent=1 // pred_check
      _
    $region23: #{tpu_custom_call.1} parent=1 // pred_check_branch
      %54 = sbr.rel (0) target = $region25
    $region24: #{tpu_custom_call.1} parent=1 // pred_region
      %55 = dma.done [#allocation9], 6144
    $region25: #{tpu_custom_call.1} parent=1 // pred_fallthru
      _
    %s56 = sld [smem:[#allocation4]]
    %s57 = ssub.s32 %s56, 1
    %p58 = scmp.lt.s32.totalorder 0, %s57
    %s59 = scalar_select %p58, 0, %s57
    %s60 = smul.u32 8, %s59
    %p61 = scmp.eq.s32.totalorder 0, 0
    // Predicated region
    $region26: #{tpu_custom_call.1} parent=1 // pred_check
      %p62 = pneg %p61
    $region27: #{tpu_custom_call.1} parent=1 // pred_check_branch
      %64 = sbr.rel (%p62) target = $region29
    $region28: #{tpu_custom_call.1} parent=1 // pred_region
      %65 = vst [vmem:[#allocation2] sm:$0xff] 0.0
      %66 = vst [vmem:[#allocation10] sm:$0xff] 0.0
    $region29: #{tpu_custom_call.1} parent=1 // pred_fallthru
      _
    %s67 = sld [smem:[#allocation4]]
    %p68 = scmp.lt.s32.totalorder 0, %s67
    // Predicated region
    $region30: #{tpu_custom_call.1} parent=1 // pred_check
      %p69 = pneg %p68
    $region31: #{tpu_custom_call.1} parent=1 // pred_check_branch
      %71 = sbr.rel (%p69) target = $region33
    $region32: #{tpu_custom_call.1} parent=1 // pred_region
      %v72 = vld [vmem:[#allocation8] sm:$0xff]
      %v73 = vld [vmem:[#allocation8 + $0x8] sm:$0xff]
      %v74 = vld [vmem:[#allocation8 + $0x10] sm:$0xff]
      %v75 = vld [vmem:[#allocation8 + $0x18] sm:$0xff]
      %v76 = vld [vmem:[#allocation8 + $0x20] sm:$0xff]
      %v77 = vld [vmem:[#allocation8 + $0x28] sm:$0xff]
      %v78 = vld [vmem:[#allocation8 + $0x30] sm:$0xff]
      %v79 = vld [vmem:[#allocation8 + $0x38] sm:$0xff]
      %v80 = vld [vmem:[#allocation8 + $0x40] sm:$0xff]
      %v81 = vld [vmem:[#allocation8 + $0x48] sm:$0xff]
      %v82 = vld [vmem:[#allocation8 + $0x50] sm:$0xff]
      %v83 = vld [vmem:[#allocation8 + $0x58] sm:$0xff]
      %v84 = vld [vmem:[#allocation8 + $0x60] sm:$0xff]
      %v85 = vld [vmem:[#allocation8 + $0x68] sm:$0xff]
      %v86 = vld [vmem:[#allocation8 + $0x70] sm:$0xff]
      %v87 = vld [vmem:[#allocation8 + $0x78] sm:$0xff]
      %v88 = vld [vmem:[#allocation8 + $0x80] sm:$0xff]
      %v89 = vld [vmem:[#allocation8 + $0x88] sm:$0xff]
      %v90 = vld [vmem:[#allocation8 + $0x90] sm:$0xff]
      %v91 = vld [vmem:[#allocation8 + $0x98] sm:$0xff]
      %v92 = vld [vmem:[#allocation8 + $0xa0] sm:$0xff]
      %v93 = vld [vmem:[#allocation8 + $0xa8] sm:$0xff]
      %v94 = vld [vmem:[#allocation8 + $0xb0] sm:$0xff]
      %v95 = vld [vmem:[#allocation8 + $0xb8] sm:$0xff]
      %v96 = vld [vmem:[#allocation8 + $0xc0] sm:$0xff]
      %v97 = vld [vmem:[#allocation8 + $0xc8] sm:$0xff]
      %v98 = vld [vmem:[#allocation8 + $0xd0] sm:$0xff]
      %v99 = vld [vmem:[#allocation8 + $0xd8] sm:$0xff]
      %v100 = vld [vmem:[#allocation8 + $0xe0] sm:$0xff]
      %v101 = vld [vmem:[#allocation8 + $0xe8] sm:$0xff]
      %v102 = vld [vmem:[#allocation8 + $0xf0] sm:$0xff]
      %v103 = vld [vmem:[#allocation8 + $0xf8] sm:$0xff]
      %v104 = vld [vmem:[#allocation8 + $0x100] sm:$0xff]
      %v105 = vld [vmem:[#allocation8 + $0x108] sm:$0xff]
      %v106 = vld [vmem:[#allocation8 + $0x110] sm:$0xff]
      %v107 = vld [vmem:[#allocation8 + $0x118] sm:$0xff]
      %v108 = vld [vmem:[#allocation8 + $0x120] sm:$0xff]
      %v109 = vld [vmem:[#allocation8 + $0x128] sm:$0xff]
      %v110 = vld [vmem:[#allocation8 + $0x130] sm:$0xff]
      %v111 = vld [vmem:[#allocation8 + $0x138] sm:$0xff]
      %v112 = vld [vmem:[#allocation8 + $0x140] sm:$0xff]
      %v113 = vld [vmem:[#allocation8 + $0x148] sm:$0xff]
      %v114 = vld [vmem:[#allocation8 + $0x150] sm:$0xff]
      %v115 = vld [vmem:[#allocation8 + $0x158] sm:$0xff]
      %v116 = vld [vmem:[#allocation8 + $0x160] sm:$0xff]
      %v117 = vld [vmem:[#allocation8 + $0x168] sm:$0xff]
      %v118 = vld [vmem:[#allocation8 + $0x170] sm:$0xff]
      %v119 = vld [vmem:[#allocation8 + $0x178] sm:$0xff]
      %v120 = vld [vmem:[%s4] sm:$0x1]
      %v121 = vld [vmem:[%s2] sm:$0xff]
      %s122 = smul.u32 0, 8
      %v123 = vld [vmem:[#allocation2] sm:$0xff]
      %v124 = vld [vmem:[#allocation10] sm:$0xff]
      %v125 = vld [vmem:[#allocation5] sm:$0xff]
      %v126 = vld [vmem:[#allocation5 + $0x8] sm:$0xff]
      %v127 = vld [vmem:[#allocation5 + $0x10] sm:$0xff]
      %128 = vmatprep.subr.mxu0 %v73
      %129 = vmatpush1.msra.mxu0 %v72
      %130 = vmatprep.subr.mxu0 %v76
      %131 = vmatpush1.msra.mxu0 %v75
      %132 = vmatprep.subr.mxu0 %v79
      %133 = vmatpush1.msra.mxu0 %v78
      %134 = vmatprep.subr.mxu0 %v82
      %135 = vmatpush1.msra.mxu0 %v81
      %136 = vmatprep.subr.mxu0 %v85
      %137 = vmatpush1.msra.mxu0 %v84
      %138 = vmatprep.subr.mxu0 %v88
      %139 = vmatpush1.msra.mxu0 %v87
      %140 = vmatprep.subr.mxu0 %v91
      %141 = vmatpush1.msra.mxu0 %v90
      %142 = vmatprep.subr.mxu0 %v94
      %143 = vmatpush1.msra.mxu0 %v93
      %144 = vmatprep.subr.mxu0 %v97
      %145 = vmatpush1.msra.mxu0 %v96
      %146 = vmatprep.subr.mxu0 %v100
      %147 = vmatpush1.msra.mxu0 %v99
      %148 = vmatprep.subr.mxu0 %v103
      %149 = vmatpush1.msra.mxu0 %v102
      %150 = vmatprep.subr.mxu0 %v106
      %151 = vmatpush1.msra.mxu0 %v105
      %152 = vmatprep.subr.mxu0 %v109
      %153 = vmatpush1.msra.mxu0 %v108
      %154 = vmatprep.subr.mxu0 %v112
      %155 = vmatpush1.msra.mxu0 %v111
      %156 = vmatprep.subr.mxu0 %v115
      %157 = vmatpush1.msra.mxu0 %v114
      %158 = vmatprep.subr.mxu0 %v118
      %159 = vmatpush1.msra.mxu0 %v117
      %160 = vmatprep.subr.mxu0 0.0
      %161 = vmatpush1.msra.mxu0 0.0
      %162 = vmatprep.subr.mxu0 0.0
      %163 = vmatpush1.msra.mxu0 0.0
      %164 = vmatprep.subr.mxu0 0.0
      %165 = vmatpush1.msra.mxu0 0.0
      %166 = vmatprep.subr.mxu0 0.0
      %167 = vmatpush1.msra.mxu0 0.0
      %168 = vmatprep.subr.mxu0 0.0
      %169 = vmatpush1.msra.mxu0 0.0
      %170 = vmatprep.subr.mxu0 0.0
      %171 = vmatpush1.msra.mxu0 0.0
      %172 = vmatprep.subr.mxu0 0.0
      %173 = vmatpush1.msra.mxu0 0.0
      %174 = vmatprep.subr.mxu0 0.0
      %175 = vmatpush1.msra.mxu0 0.0
      %176 = vmatprep.subr.mxu0 0.0
      %177 = vmatpush1.msra.mxu0 0.0
      %178 = vmatprep.subr.mxu0 0.0
      %179 = vmatpush1.msra.mxu0 0.0
      %180 = vmatprep.subr.mxu0 0.0
      %181 = vmatpush1.msra.mxu0 0.0
      %182 = vmatprep.subr.mxu0 0.0
      %183 = vmatpush1.msra.mxu0 0.0
      %184 = vmatprep.subr.mxu0 0.0
      %185 = vmatpush1.msra.mxu0 0.0
      %186 = vmatprep.subr.mxu0 0.0
      %187 = vmatpush1.msra.mxu0 0.0
      %188 = vmatprep.subr.mxu0 0.0
      %189 = vmatpush1.msra.mxu0 0.0
      %190 = vmatprep.subr.mxu0 0.0
      %191 = vmatpush1.msra.mxu0 0.0
      %192 = vmatprep.mubr.f32.mxu0 0.0
      %193 = vmatmul.mubr.f32.gmra.mrb[0].mxu0 %v123
      %v194 = vpop.f32.mrb[0].mxu0
      %v195 = vadd.f32 0.0, %v194
      %v196 = vpop.f32.mrb[0].mxu0
      %v197 = vadd.f32 0.0, %v196
      %198 = vdwg.mxu0
      %v199 = vadd.f32 %v125, %v195
      %v200 = vxor.u32 %v199, 2147483648
      %v201 = vmul.f32 %v200, 1.442695
      %v202 = vpow.pop %v201
      %v203 = vadd.f32 %v202, 1.0
      %v204 = vrcp.pop %v203
      %v205 = vmul.f32 1.0, %v204
      %v206 = vadd.f32 %v126, %v197
      %v207 = vxor.u32 %v206, 2147483648
      %v208 = vmul.f32 %v207, 1.442695
      %v209 = vpow.pop %v208
      %v210 = vadd.f32 %v209, 1.0
      %v211 = vrcp.pop %v210
      %v212 = vmul.f32 1.0, %v211
      %v214 = vlaneseq
      %v215 = vshrl.u32 %v214, 7
      %v216 = vsub.s32 0, %v215
      %v217 = vrot.slane %v120, %v216
      %219 = vmatprep.subr.mxu0 0.0
      %220 = vmatpush1.msra.mxu0 %v74
      %221 = vmatprep.subr.mxu0 0.0
      %222 = vmatpush1.msra.mxu0 %v77
      %223 = vmatprep.subr.mxu0 0.0
      %224 = vmatpush1.msra.mxu0 %v80
      %225 = vmatprep.subr.mxu0 0.0
      %226 = vmatpush1.msra.mxu0 %v83
      %227 = vmatprep.subr.mxu0 0.0
      %228 = vmatpush1.msra.mxu0 %v86
      %229 = vmatprep.subr.mxu0 0.0
      %230 = vmatpush1.msra.mxu0 %v89
      %231 = vmatprep.subr.mxu0 0.0
      %232 = vmatpush1.msra.mxu0 %v92
      %233 = vmatprep.subr.mxu0 0.0
      %234 = vmatpush1.msra.mxu0 %v95
      %235 = vmatprep.subr.mxu0 0.0
      %236 = vmatpush1.msra.mxu0 %v98
      %237 = vmatprep.subr.mxu0 0.0
      %238 = vmatpush1.msra.mxu0 %v101
      %239 = vmatprep.subr.mxu0 0.0
      %240 = vmatpush1.msra.mxu0 %v104
      %241 = vmatprep.subr.mxu0 0.0
      %242 = vmatpush1.msra.mxu0 %v107
      %243 = vmatprep.subr.mxu0 0.0
      %244 = vmatpush1.msra.mxu0 %v110
      %245 = vmatprep.subr.mxu0 0.0
      %246 = vmatpush1.msra.mxu0 %v113
      %247 = vmatprep.subr.mxu0 0.0
      %248 = vmatpush1.msra.mxu0 %v116
      %249 = vmatprep.subr.mxu0 0.0
      %250 = vmatpush1.msra.mxu0 %v119
      %251 = vmatprep.subr.mxu0 0.0
      %252 = vmatpush1.msra.mxu0 0.0
      %253 = vmatprep.subr.mxu0 0.0
      %254 = vmatpush1.msra.mxu0 0.0
      %255 = vmatprep.subr.mxu0 0.0
      %256 = vmatpush1.msra.mxu0 0.0
      %257 = vmatprep.subr.mxu0 0.0
      %258 = vmatpush1.msra.mxu0 0.0
      %259 = vmatprep.subr.mxu0 0.0
      %260 = vmatpush1.msra.mxu0 0.0
      %261 = vmatprep.subr.mxu0 0.0
      %262 = vmatpush1.msra.mxu0 0.0
      %263 = vmatprep.subr.mxu0 0.0
      %264 = vmatpush1.msra.mxu0 0.0
      %265 = vmatprep.subr.mxu0 0.0
      %266 = vmatpush1.msra.mxu0 0.0
      %267 = vmatprep.subr.mxu0 0.0
      %268 = vmatpush1.msra.mxu0 0.0
      %269 = vmatprep.subr.mxu0 0.0
      %270 = vmatpush1.msra.mxu0 0.0
      %271 = vmatprep.subr.mxu0 0.0
      %272 = vmatpush1.msra.mxu0 0.0
      %273 = vmatprep.subr.mxu0 0.0
      %274 = vmatpush1.msra.mxu0 0.0
      %275 = vmatprep.subr.mxu0 0.0
      %276 = vmatpush1.msra.mxu0 0.0
      %277 = vmatprep.subr.mxu0 0.0
      %278 = vmatpush1.msra.mxu0 0.0
      %279 = vmatprep.subr.mxu0 0.0
      %280 = vmatpush1.msra.mxu0 0.0
      %281 = vmatprep.subr.mxu0 0.0
      %282 = vmatpush1.msra.mxu0 0.0
      %283 = vmatprep.mubr.f32.mxu0 0.0
      %284 = vmatmul.mubr.f32.gmra.mrb[0].mxu0 %v123
      %v285 = vpop.f32.mrb[0].mxu0
      %v286 = vadd.f32 %v217, %v285
      %v287 = vpop.f32.mrb[0].mxu0
      %288 = vdwg.mxu0
      %v289 = vmul.f32 %v205, %v286
      %v290 = vadd.f32 %v127, %v289
      %v291 = vtanh.pop %v290
      %v292 = vsub.f32 1.0, %v212
      %v293 = vmul.f32 %v292, %v291
      %v294 = vmul.f32 %v212, %v123
      %v295 = vadd.f32 %v293, %v294
      %s296 = sadd.s32 %s122, 1
      %v297 = vstv %s296
      %vm298 = vcmp.eq.s32.totalorder %v121, %v297
      %v299 = vsel %vm298, 1, 0
      %300 = vset.pattern.permute.xlu0 0
      %301 = vperm.xlu0 %300, %v299
      %v302 = vpop.permute.xlu0 %301
      %vm303 = vcmp.eq.s32.totalorder %v302, 1
      %v304 = vsel %vm303, %v295, %v124
      %s305 = scalar_lea.vmem [#allocation5], 24
      %v306 = vld [vmem:[%s305] sm:$0xff]
      %v307 = vld [vmem:[%s305 + $0x8] sm:$0xff]
      %v308 = vld [vmem:[%s305 + $0x10] sm:$0xff]
      %309 = vmatprep.subr.mxu0 %v73
      %310 = vmatpush1.msra.mxu0 %v72
      %311 = vmatprep.subr.mxu0 %v76
      %312 = vmatpush1.msra.mxu0 %v75
      %313 = vmatprep.subr.mxu0 %v79
      %314 = vmatpush1.msra.mxu0 %v78
      %315 = vmatprep.subr.mxu0 %v82
      %316 = vmatpush1.msra.mxu0 %v81
      %317 = vmatprep.subr.mxu0 %v85
      %318 = vmatpush1.msra.mxu0 %v84
      %319 = vmatprep.subr.mxu0 %v88
      %320 = vmatpush1.msra.mxu0 %v87
      %321 = vmatprep.subr.mxu0 %v91
      %322 = vmatpush1.msra.mxu0 %v90
      %323 = vmatprep.subr.mxu0 %v94
      %324 = vmatpush1.msra.mxu0 %v93
      %325 = vmatprep.subr.mxu0 %v97
      %326 = vmatpush1.msra.mxu0 %v96
      %327 = vmatprep.subr.mxu0 %v100
      %328 = vmatpush1.msra.mxu0 %v99
      %329 = vmatprep.subr.mxu0 %v103
      %330 = vmatpush1.msra.mxu0 %v102
      %331 = vmatprep.subr.mxu0 %v106
      %332 = vmatpush1.msra.mxu0 %v105
      %333 = vmatprep.subr.mxu0 %v109
      %334 = vmatpush1.msra.mxu0 %v108
      %335 = vmatprep.subr.mxu0 %v112
      %336 = vmatpush1.msra.mxu0 %v111
      %337 = vmatprep.subr.mxu0 %v115
      %338 = vmatpush1.msra.mxu0 %v114
      %339 = vmatprep.subr.mxu0 %v118
      %340 = vmatpush1.msra.mxu0 %v117
      %341 = vmatprep.subr.mxu0 0.0
      %342 = vmatpush1.msra.mxu0 0.0
      %343 = vmatprep.subr.mxu0 0.0
      %344 = vmatpush1.msra.mxu0 0.0
      %345 = vmatprep.subr.mxu0 0.0
      %346 = vmatpush1.msra.mxu0 0.0
      %347 = vmatprep.subr.mxu0 0.0
      %348 = vmatpush1.msra.mxu0 0.0
      %349 = vmatprep.subr.mxu0 0.0
      %350 = vmatpush1.msra.mxu0 0.0
      %351 = vmatprep.subr.mxu0 0.0
      %352 = vmatpush1.msra.mxu0 0.0
      %353 = vmatprep.subr.mxu0 0.0
      %354 = vmatpush1.msra.mxu0 0.0
      %355 = vmatprep.subr.mxu0 0.0
      %356 = vmatpush1.msra.mxu0 0.0
      %357 = vmatprep.subr.mxu0 0.0
      %358 = vmatpush1.msra.mxu0 0.0
      %359 = vmatprep.subr.mxu0 0.0
      %360 = vmatpush1.msra.mxu0 0.0
      %361 = vmatprep.subr.mxu0 0.0
      %362 = vmatpush1.msra.mxu0 0.0
      %363 = vmatprep.subr.mxu0 0.0
      %364 = vmatpush1.msra.mxu0 0.0
      %365 = vmatprep.subr.mxu0 0.0
      %366 = vmatpush1.msra.mxu0 0.0
      %367 = vmatprep.subr.mxu0 0.0
      %368 = vmatpush1.msra.mxu0 0.0
      %369 = vmatprep.subr.mxu0 0.0
      %370 = vmatpush1.msra.mxu0 0.0
      %371 = vmatprep.subr.mxu0 0.0
      %372 = vmatpush1.msra.mxu0 0.0
      %373 = vmatprep.mubr.f32.mxu0 0.0
      %374 = vmatmul.mubr.f32.gmra.mrb[0].mxu0 %v295
      %v375 = vpop.f32.mrb[0].mxu0
      %v376 = vadd.f32 0.0, %v375
      %v377 = vpop.f32.mrb[0].mxu0
      %v378 = vadd.f32 0.0, %v377
      %379 = vdwg.mxu0
      %v380 = vadd.f32 %v306, %v376
      %v381 = vxor.u32 %v380, 2147483648
      %v382 = vmul.f32 %v381, 1.442695
      %v383 = vpow.pop %v382
      %v384 = vadd.f32 %v383, 1.0
      %v385 = vrcp.pop %v384
      %v386 = vmul.f32 1.0, %v385
      %v387 = vadd.f32 %v307, %v378
      %v388 = vxor.u32 %v387, 2147483648
      %v389 = vmul.f32 %v388, 1.442695
      %v390 = vpow.pop %v389
      %v391 = vadd.f32 %v390, 1.0
      %v392 = vrcp.pop %v391
      %v393 = vmul.f32 1.0, %v392
      %394 = vmatprep.subr.mxu0 0.0
      %395 = vmatpush1.msra.mxu0 %v74
      %396 = vmatprep.subr.mxu0 0.0
      %397 = vmatpush1.msra.mxu0 %v77
      %398 = vmatprep.subr.mxu0 0.0
      %399 = vmatpush1.msra.mxu0 %v80
      %400 = vmatprep.subr.mxu0 0.0
      %401 = vmatpush1.msra.mxu0 %v83
      %402 = vmatprep.subr.mxu0 0.0
      %403 = vmatpush1.msra.mxu0 %v86
      %404 = vmatprep.subr.mxu0 0.0
      %405 = vmatpush1.msra.mxu0 %v89
      %406 = vmatprep.subr.mxu0 0.0
      %407 = vmatpush1.msra.mxu0 %v92
      %408 = vmatprep.subr.mxu0 0.0
      %409 = vmatpush1.msra.mxu0 %v95
      %410 = vmatprep.subr.mxu0 0.0
      %411 = vmatpush1.msra.mxu0 %v98
      %412 = vmatprep.subr.mxu0 0.0
      %413 = vmatpush1.msra.mxu0 %v101
      %414 = vmatprep.subr.mxu0 0.0
      %415 = vmatpush1.msra.mxu0 %v104
      %416 = vmatprep.subr.mxu0 0.0
      %417 = vmatpush1.msra.mxu0 %v107
      %418 = vmatprep.subr.mxu0 0.0
      %419 = vmatpush1.msra.mxu0 %v110
      %420 = vmatprep.subr.mxu0 0.0
      %421 = vmatpush1.msra.mxu0 %v113
      %422 = vmatprep.subr.mxu0 0.0
      %423 = vmatpush1.msra.mxu0 %v116
      %424 = vmatprep.subr.mxu0 0.0
      %425 = vmatpush1.msra.mxu0 %v119
      %426 = vmatprep.subr.mxu0 0.0
      %427 = vmatpush1.msra.mxu0 0.0
      %428 = vmatprep.subr.mxu0 0.0
      %429 = vmatpush1.msra.mxu0 0.0
      %430 = vmatprep.subr.mxu0 0.0
      %431 = vmatpush1.msra.mxu0 0.0
      %432 = vmatprep.subr.mxu0 0.0
      %433 = vmatpush1.msra.mxu0 0.0
      %434 = vmatprep.subr.mxu0 0.0
      %435 = vmatpush1.msra.mxu0 0.0
      %436 = vmatprep.subr.mxu0 0.0
      %437 = vmatpush1.msra.mxu0 0.0
      %438 = vmatprep.subr.mxu0 0.0
      %439 = vmatpush1.msra.mxu0 0.0
      %440 = vmatprep.subr.mxu0 0.0
      %441 = vmatpush1.msra.mxu0 0.0
      %442 = vmatprep.subr.mxu0 0.0
      %443 = vmatpush1.msra.mxu0 0.0
      %444 = vmatprep.subr.mxu0 0.0
      %445 = vmatpush1.msra.mxu0 0.0
      %446 = vmatprep.subr.mxu0 0.0
      %447 = vmatpush1.msra.mxu0 0.0
      %448 = vmatprep.subr.mxu0 0.0
      %449 = vmatpush1.msra.mxu0 0.0
      %450 = vmatprep.subr.mxu0 0.0
      %451 = vmatpush1.msra.mxu0 0.0
      %452 = vmatprep.subr.mxu0 0.0
      %453 = vmatpush1.msra.mxu0 0.0
      %454 = vmatprep.subr.mxu0 0.0
      %455 = vmatpush1.msra.mxu0 0.0
      %456 = vmatprep.subr.mxu0 0.0
      %457 = vmatpush1.msra.mxu0 0.0
      %458 = vmatprep.mubr.f32.mxu0 0.0
      %459 = vmatmul.mubr.f32.gmra.mrb[0].mxu0 %v295
      %v460 = vpop.f32.mrb[0].mxu0
      %v461 = vadd.f32 %v217, %v460
      %v462 = vpop.f32.mrb[0].mxu0
      %463 = vdwg.mxu0
      %v464 = vmul.f32 %v386, %v461
      %v465 = vadd.f32 %v308, %v464
      %v466 = vtanh.pop %v465
      %v467 = vsub.f32 1.0, %v393
      %v468 = vmul.f32 %v467, %v466
      %v469 = vmul.f32 %v393, %v295
      %v470 = vadd.f32 %v468, %v469
      %s471 = sadd.s32 %s122, 2
      %v472 = vstv %s471
      %vm473 = vcmp.eq.s32.totalorder %v121, %v472
      %v474 = vsel %vm473, 1, 0
      %475 = vset.pattern.permute.xlu0 0
      %476 = vperm.xlu0 %475, %v474
      %v477 = vpop.permute.xlu0 %476
      %vm478 = vcmp.eq.s32.totalorder %v477, 1
      %v479 = vsel %vm478, %v470, %v304
      %s480 = scalar_lea.vmem [#allocation5], 48
      %v481 = vld [vmem:[%s480] sm:$0xff]
      %v482 = vld [vmem:[%s480 + $0x8] sm:$0xff]
      %v483 = vld [vmem:[%s480 + $0x10] sm:$0xff]
      %484 = vmatprep.subr.mxu0 %v73
      %485 = vmatpush1.msra.mxu0 %v72
      %486 = vmatprep.subr.mxu0 %v76
      %487 = vmatpush1.msra.mxu0 %v75
      %488 = vmatprep.subr.mxu0 %v79
      %489 = vmatpush1.msra.mxu0 %v78
      %490 = vmatprep.subr.mxu0 %v82
      %491 = vmatpush1.msra.mxu0 %v81
      %492 = vmatprep.subr.mxu0 %v85
      %493 = vmatpush1.msra.mxu0 %v84
      %494 = vmatprep.subr.mxu0 %v88
      %495 = vmatpush1.msra.mxu0 %v87
      %496 = vmatprep.subr.mxu0 %v91
      %497 = vmatpush1.msra.mxu0 %v90
      %498 = vmatprep.subr.mxu0 %v94
      %499 = vmatpush1.msra.mxu0 %v93
      %500 = vmatprep.subr.mxu0 %v97
      %501 = vmatpush1.msra.mxu0 %v96
      %502 = vmatprep.subr.mxu0 %v100
      %503 = vmatpush1.msra.mxu0 %v99
      %504 = vmatprep.subr.mxu0 %v103
      %505 = vmatpush1.msra.mxu0 %v102
      %506 = vmatprep.subr.mxu0 %v106
      %507 = vmatpush1.msra.mxu0 %v105
      %508 = vmatprep.subr.mxu0 %v109
      %509 = vmatpush1.msra.mxu0 %v108
      %510 = vmatprep.subr.mxu0 %v112
      %511 = vmatpush1.msra.mxu0 %v111
      %512 = vmatprep.subr.mxu0 %v115
      %513 = vmatpush1.msra.mxu0 %v114
      %514 = vmatprep.subr.mxu0 %v118
      %515 = vmatpush1.msra.mxu0 %v117
      %516 = vmatprep.subr.mxu0 0.0
      %517 = vmatpush1.msra.mxu0 0.0
      %518 = vmatprep.subr.mxu0 0.0
      %519 = vmatpush1.msra.mxu0 0.0
      %520 = vmatprep.subr.mxu0 0.0
      %521 = vmatpush1.msra.mxu0 0.0
      %522 = vmatprep.subr.mxu0 0.0
      %523 = vmatpush1.msra.mxu0 0.0
      %524 = vmatprep.subr.mxu0 0.0
      %525 = vmatpush1.msra.mxu0 0.0
      %526 = vmatprep.subr.mxu0 0.0
      %527 = vmatpush1.msra.mxu0 0.0
      %528 = vmatprep.subr.mxu0 0.0
      %529 = vmatpush1.msra.mxu0 0.0
      %530 = vmatprep.subr.mxu0 0.0
      %531 = vmatpush1.msra.mxu0 0.0
      %532 = vmatprep.subr.mxu0 0.0
      %533 = vmatpush1.msra.mxu0 0.0
      %534 = vmatprep.subr.mxu0 0.0
      %535 = vmatpush1.msra.mxu0 0.0
      %536 = vmatprep.subr.mxu0 0.0
      %537 = vmatpush1.msra.mxu0 0.0
      %538 = vmatprep.subr.mxu0 0.0
      %539 = vmatpush1.msra.mxu0 0.0
      %540 = vmatprep.subr.mxu0 0.0
      %541 = vmatpush1.msra.mxu0 0.0
      %542 = vmatprep.subr.mxu0 0.0
      %543 = vmatpush1.msra.mxu0 0.0
      %544 = vmatprep.subr.mxu0 0.0
      %545 = vmatpush1.msra.mxu0 0.0
      %546 = vmatprep.subr.mxu0 0.0
      %547 = vmatpush1.msra.mxu0 0.0
      %548 = vmatprep.mubr.f32.mxu0 0.0
      %549 = vmatmul.mubr.f32.gmra.mrb[0].mxu0 %v470
      %v550 = vpop.f32.mrb[0].mxu0
      %v551 = vadd.f32 0.0, %v550
      %v552 = vpop.f32.mrb[0].mxu0
      %v553 = vadd.f32 0.0, %v552
      %554 = vdwg.mxu0
      %v555 = vadd.f32 %v481, %v551
      %v556 = vxor.u32 %v555, 2147483648
      %v557 = vmul.f32 %v556, 1.442695
      %v558 = vpow.pop %v557
      %v559 = vadd.f32 %v558, 1.0
      %v560 = vrcp.pop %v559
      %v561 = vmul.f32 1.0, %v560
      %v562 = vadd.f32 %v482, %v553
      %v563 = vxor.u32 %v562, 2147483648
      %v564 = vmul.f32 %v563, 1.442695
      %v565 = vpow.pop %v564
      %v566 = vadd.f32 %v565, 1.0
      %v567 = vrcp.pop %v566
      %v568 = vmul.f32 1.0, %v567
      %569 = vmatprep.subr.mxu0 0.0
      %570 = vmatpush1.msra.mxu0 %v74
      %571 = vmatprep.subr.mxu0 0.0
      %572 = vmatpush1.msra.mxu0 %v77
      %573 = vmatprep.subr.mxu0 0.0
      %574 = vmatpush1.msra.mxu0 %v80
      %575 = vmatprep.subr.mxu0 0.0
      %576 = vmatpush1.msra.mxu0 %v83
      %577 = vmatprep.subr.mxu0 0.0
      %578 = vmatpush1.msra.mxu0 %v86
      %579 = vmatprep.subr.mxu0 0.0
      %580 = vmatpush1.msra.mxu0 %v89
      %581 = vmatprep.subr.mxu0 0.0
      %582 = vmatpush1.msra.mxu0 %v92
      %583 = vmatprep.subr.mxu0 0.0
      %584 = vmatpush1.msra.mxu0 %v95
      %585 = vmatprep.subr.mxu0 0.0
      %586 = vmatpush1.msra.mxu0 %v98
      %587 = vmatprep.subr.mxu0 0.0
      %588 = vmatpush1.msra.mxu0 %v101
      %589 = vmatprep.subr.mxu0 0.0
      %590 = vmatpush1.msra.mxu0 %v104
      %591 = vmatprep.subr.mxu0 0.0
      %592 = vmatpush1.msra.mxu0 %v107
      %593 = vmatprep.subr.mxu0 0.0
      %594 = vmatpush1.msra.mxu0 %v110
      %595 = vmatprep.subr.mxu0 0.0
      %596 = vmatpush1.msra.mxu0 %v113
      %597 = vmatprep.subr.mxu0 0.0
      %598 = vmatpush1.msra.mxu0 %v116
      %599 = vmatprep.subr.mxu0 0.0
      %600 = vmatpush1.msra.mxu0 %v119
      %601 = vmatprep.subr.mxu0 0.0
      %602 = vmatpush1.msra.mxu0 0.0
      %603 = vmatprep.subr.mxu0 0.0
      %604 = vmatpush1.msra.mxu0 0.0
      %605 = vmatprep.subr.mxu0 0.0
      %606 = vmatpush1.msra.mxu0 0.0
      %607 = vmatprep.subr.mxu0 0.0
      %608 = vmatpush1.msra.mxu0 0.0
      %609 = vmatprep.subr.mxu0 0.0
      %610 = vmatpush1.msra.mxu0 0.0
      %611 = vmatprep.subr.mxu0 0.0
      %612 = vmatpush1.msra.mxu0 0.0
      %613 = vmatprep.subr.mxu0 0.0
      %614 = vmatpush1.msra.mxu0 0.0
      %615 = vmatprep.subr.mxu0 0.0
      %616 = vmatpush1.msra.mxu0 0.0
      %617 = vmatprep.subr.mxu0 0.0
      %618 = vmatpush1.msra.mxu0 0.0
      %619 = vmatprep.subr.mxu0 0.0
      %620 = vmatpush1.msra.mxu0 0.0
      %621 = vmatprep.subr.mxu0 0.0
      %622 = vmatpush1.msra.mxu0 0.0
      %623 = vmatprep.subr.mxu0 0.0
      %624 = vmatpush1.msra.mxu0 0.0
      %625 = vmatprep.subr.mxu0 0.0
      %626 = vmatpush1.msra.mxu0 0.0
      %627 = vmatprep.subr.mxu0 0.0
      %628 = vmatpush1.msra.mxu0 0.0
      %629 = vmatprep.subr.mxu0 0.0
      %630 = vmatpush1.msra.mxu0 0.0
      %631 = vmatprep.subr.mxu0 0.0
      %632 = vmatpush1.msra.mxu0 0.0
      %633 = vmatprep.mubr.f32.mxu0 0.0
      %634 = vmatmul.mubr.f32.gmra.mrb[0].mxu0 %v470
      %v635 = vpop.f32.mrb[0].mxu0
      %v636 = vadd.f32 %v217, %v635
      %v637 = vpop.f32.mrb[0].mxu0
      %638 = vdwg.mxu0
      %v639 = vmul.f32 %v561, %v636
      %v640 = vadd.f32 %v483, %v639
      %v641 = vtanh.pop %v640
      %v642 = vsub.f32 1.0, %v568
      %v643 = vmul.f32 %v642, %v641
      %v644 = vmul.f32 %v568, %v470
      %v645 = vadd.f32 %v643, %v644
      %s646 = sadd.s32 %s122, 3
      %v647 = vstv %s646
      %vm648 = vcmp.eq.s32.totalorder %v121, %v647
      %v649 = vsel %vm648, 1, 0
      %650 = vset.pattern.permute.xlu0 0
      %651 = vperm.xlu0 %650, %v649
      %v652 = vpop.permute.xlu0 %651
      %vm653 = vcmp.eq.s32.totalorder %v652, 1
      %v654 = vsel %vm653, %v645, %v479
      %s655 = scalar_lea.vmem [#allocation5], 72
      %v656 = vld [vmem:[%s655] sm:$0xff]
      %v657 = vld [vmem:[%s655 + $0x8] sm:$0xff]
      %v658 = vld [vmem:[%s655 + $0x10] sm:$0xff]
      %659 = vmatprep.subr.mxu0 %v73
      %660 = vmatpush1.msra.mxu0 %v72
      %661 = vmatprep.subr.mxu0 %v76
      %662 = vmatpush1.msra.mxu0 %v75
      %663 = vmatprep.subr.mxu0 %v79
      %664 = vmatpush1.msra.mxu0 %v78
      %665 = vmatprep.subr.mxu0 %v82
      %666 = vmatpush1.msra.mxu0 %v81
      %667 = vmatprep.subr.mxu0 %v85
      %668 = vmatpush1.msra.mxu0 %v84
      %669 = vmatprep.subr.mxu0 %v88
      %670 = vmatpush1.msra.mxu0 %v87
      %671 = vmatprep.subr.mxu0 %v91
      %672 = vmatpush1.msra.mxu0 %v90
      %673 = vmatprep.subr.mxu0 %v94
      %674 = vmatpush1.msra.mxu0 %v93
      %675 = vmatprep.subr.mxu0 %v97
      %676 = vmatpush1.msra.mxu0 %v96
      %677 = vmatprep.subr.mxu0 %v100
      %678 = vmatpush1.msra.mxu0 %v99
      %679 = vmatprep.subr.mxu0 %v103
      %680 = vmatpush1.msra.mxu0 %v102
      %681 = vmatprep.subr.mxu0 %v106
      %682 = vmatpush1.msra.mxu0 %v105
      %683 = vmatprep.subr.mxu0 %v109
      %684 = vmatpush1.msra.mxu0 %v108
      %685 = vmatprep.subr.mxu0 %v112
      %686 = vmatpush1.msra.mxu0 %v111
      %687 = vmatprep.subr.mxu0 %v115
      %688 = vmatpush1.msra.mxu0 %v114
      %689 = vmatprep.subr.mxu0 %v118
      %690 = vmatpush1.msra.mxu0 %v117
      %691 = vmatprep.subr.mxu0 0.0
      %692 = vmatpush1.msra.mxu0 0.0
      %693 = vmatprep.subr.mxu0 0.0
      %694 = vmatpush1.msra.mxu0 0.0
      %695 = vmatprep.subr.mxu0 0.0
      %696 = vmatpush1.msra.mxu0 0.0
      %697 = vmatprep.subr.mxu0 0.0
      %698 = vmatpush1.msra.mxu0 0.0
      %699 = vmatprep.subr.mxu0 0.0
      %700 = vmatpush1.msra.mxu0 0.0
      %701 = vmatprep.subr.mxu0 0.0
      %702 = vmatpush1.msra.mxu0 0.0
      %703 = vmatprep.subr.mxu0 0.0
      %704 = vmatpush1.msra.mxu0 0.0
      %705 = vmatprep.subr.mxu0 0.0
      %706 = vmatpush1.msra.mxu0 0.0
      %707 = vmatprep.subr.mxu0 0.0
      %708 = vmatpush1.msra.mxu0 0.0
      %709 = vmatprep.subr.mxu0 0.0
      %710 = vmatpush1.msra.mxu0 0.0
      %711 = vmatprep.subr.mxu0 0.0
      %712 = vmatpush1.msra.mxu0 0.0
      %713 = vmatprep.subr.mxu0 0.0
      %714 = vmatpush1.msra.mxu0 0.0
      %715 = vmatprep.subr.mxu0 0.0
      %716 = vmatpush1.msra.mxu0 0.0
      %717 = vmatprep.subr.mxu0 0.0
      %718 = vmatpush1.msra.mxu0 0.0
      %719 = vmatprep.subr.mxu0 0.0
      %720 = vmatpush1.msra.mxu0 0.0
      %721 = vmatprep.subr.mxu0 0.0
      %722 = vmatpush1.msra.mxu0 0.0
      %723 = vmatprep.mubr.f32.mxu0 0.0
      %724 = vmatmul.mubr.f32.gmra.mrb[0].mxu0 %v645
      %v725 = vpop.f32.mrb[0].mxu0
      %v726 = vadd.f32 0.0, %v725
      %v727 = vpop.f32.mrb[0].mxu0
      %v728 = vadd.f32 0.0, %v727
      %729 = vdwg.mxu0
      %v730 = vadd.f32 %v656, %v726
      %v731 = vxor.u32 %v730, 2147483648
      %v732 = vmul.f32 %v731, 1.442695
      %v733 = vpow.pop %v732
      %v734 = vadd.f32 %v733, 1.0
      %v735 = vrcp.pop %v734
      %v736 = vmul.f32 1.0, %v735
      %v737 = vadd.f32 %v657, %v728
      %v738 = vxor.u32 %v737, 2147483648
      %v739 = vmul.f32 %v738, 1.442695
      %v740 = vpow.pop %v739
      %v741 = vadd.f32 %v740, 1.0
      %v742 = vrcp.pop %v741
      %v743 = vmul.f32 1.0, %v742
      %744 = vmatprep.subr.mxu0 0.0
      %745 = vmatpush1.msra.mxu0 %v74
      %746 = vmatprep.subr.mxu0 0.0
      %747 = vmatpush1.msra.mxu0 %v77
      %748 = vmatprep.subr.mxu0 0.0
      %749 = vmatpush1.msra.mxu0 %v80
      %750 = vmatprep.subr.mxu0 0.0
      %751 = vmatpush1.msra.mxu0 %v83
      %752 = vmatprep.subr.mxu0 0.0
      %753 = vmatpush1.msra.mxu0 %v86
      %754 = vmatprep.subr.mxu0 0.0
      %755 = vmatpush1.msra.mxu0 %v89
      %756 = vmatprep.subr.mxu0 0.0
      %757 = vmatpush1.msra.mxu0 %v92
      %758 = vmatprep.subr.mxu0 0.0
      %759 = vmatpush1.msra.mxu0 %v95
      %760 = vmatprep.subr.mxu0 0.0
      %761 = vmatpush1.msra.mxu0 %v98
      %762 = vmatprep.subr.mxu0 0.0
      %763 = vmatpush1.msra.mxu0 %v101
      %764 = vmatprep.subr.mxu0 0.0
      %765 = vmatpush1.msra.mxu0 %v104
      %766 = vmatprep.subr.mxu0 0.0
      %767 = vmatpush1.msra.mxu0 %v107
      %768 = vmatprep.subr.mxu0 0.0
      %769 = vmatpush1.msra.mxu0 %v110
      %770 = vmatprep.subr.mxu0 0.0
      %771 = vmatpush1.msra.mxu0 %v113
      %772 = vmatprep.subr.mxu0 0.0
      %773 = vmatpush1.msra.mxu0 %v116
      %774 = vmatprep.subr.mxu0 0.0
      %775 = vmatpush1.msra.mxu0 %v119
      %776 = vmatprep.subr.mxu0 0.0
      %777 = vmatpush1.msra.mxu0 0.0
      %778 = vmatprep.subr.mxu0 0.0
      %779 = vmatpush1.msra.mxu0 0.0
      %780 = vmatprep.subr.mxu0 0.0
      %781 = vmatpush1.msra.mxu0 0.0
      %782 = vmatprep.subr.mxu0 0.0
      %783 = vmatpush1.msra.mxu0 0.0
      %784 = vmatprep.subr.mxu0 0.0
      %785 = vmatpush1.msra.mxu0 0.0
      %786 = vmatprep.subr.mxu0 0.0
      %787 = vmatpush1.msra.mxu0 0.0
      %788 = vmatprep.subr.mxu0 0.0
      %789 = vmatpush1.msra.mxu0 0.0
      %790 = vmatprep.subr.mxu0 0.0
      %791 = vmatpush1.msra.mxu0 0.0
      %792 = vmatprep.subr.mxu0 0.0
      %793 = vmatpush1.msra.mxu0 0.0
      %794 = vmatprep.subr.mxu0 0.0
      %795 = vmatpush1.msra.mxu0 0.0
      %796 = vmatprep.subr.mxu0 0.0
      %797 = vmatpush1.msra.mxu0 0.0
      %798 = vmatprep.subr.mxu0 0.0
      %799 = vmatpush1.msra.mxu0 0.0
      %800 = vmatprep.subr.mxu0 0.0
      %801 = vmatpush1.msra.mxu0 0.0
      %802 = vmatprep.subr.mxu0 0.0
      %803 = vmatpush1.msra.mxu0 0.0
      %804 = vmatprep.subr.mxu0 0.0
      %805 = vmatpush1.msra.mxu0 0.0
      %806 = vmatprep.subr.mxu0 0.0
      %807 = vmatpush1.msra.mxu0 0.0
      %808 = vmatprep.mubr.f32.mxu0 0.0
      %809 = vmatmul.mubr.f32.gmra.mrb[0].mxu0 %v645
      %v810 = vpop.f32.mrb[0].mxu0
      %v811 = vadd.f32 %v217, %v810
      %v812 = vpop.f32.mrb[0].mxu0
      %813 = vdwg.mxu0
      %v814 = vmul.f32 %v736, %v811
      %v815 = vadd.f32 %v658, %v814
      %v816 = vtanh.pop %v815
      %v817 = vsub.f32 1.0, %v743
      %v818 = vmul.f32 %v817, %v816
      %v819 = vmul.f32 %v743, %v645
      %v820 = vadd.f32 %v818, %v819
      %s821 = sadd.s32 %s122, 4
      %v822 = vstv %s821
      %vm823 = vcmp.eq.s32.totalorder %v121, %v822
      %v824 = vsel %vm823, 1, 0
      %825 = vset.pattern.permute.xlu0 0
      %826 = vperm.xlu0 %825, %v824
      %v827 = vpop.permute.xlu0 %826
      %vm828 = vcmp.eq.s32.totalorder %v827, 1
      %v829 = vsel %vm828, %v820, %v654
      %s830 = scalar_lea.vmem [#allocation5], 96
      %v831 = vld [vmem:[%s830] sm:$0xff]
      %v832 = vld [vmem:[%s830 + $0x8] sm:$0xff]
      %v833 = vld [vmem:[%s830 + $0x10] sm:$0xff]
      %834 = vmatprep.subr.mxu0 %v73
      %835 = vmatpush1.msra.mxu0 %v72
      %836 = vmatprep.subr.mxu0 %v76
      %837 = vmatpush1.msra.mxu0 %v75
      %838 = vmatprep.subr.mxu0 %v79
      %839 = vmatpush1.msra.mxu0 %v78
      %840 = vmatprep.subr.mxu0 %v82
      %841 = vmatpush1.msra.mxu0 %v81
      %842 = vmatprep.subr.mxu0 %v85
      %843 = vmatpush1.msra.mxu0 %v84
      %844 = vmatprep.subr.mxu0 %v88
      %845 = vmatpush1.msra.mxu0 %v87
      %846 = vmatprep.subr.mxu0 %v91
      %847 = vmatpush1.msra.mxu0 %v90
      %848 = vmatprep.subr.mxu0 %v94
      %849 = vmatpush1.msra.mxu0 %v93
      %850 = vmatprep.subr.mxu0 %v97
      %851 = vmatpush1.msra.mxu0 %v96
      %852 = vmatprep.subr.mxu0 %v100
      %853 = vmatpush1.msra.mxu0 %v99
      %854 = vmatprep.subr.mxu0 %v103
      %855 = vmatpush1.msra.mxu0 %v102
      %856 = vmatprep.subr.mxu0 %v106
      %857 = vmatpush1.msra.mxu0 %v105
      %858 = vmatprep.subr.mxu0 %v109
      %859 = vmatpush1.msra.mxu0 %v108
      %860 = vmatprep.subr.mxu0 %v112
      %861 = vmatpush1.msra.mxu0 %v111
      %862 = vmatprep.subr.mxu0 %v115
      %863 = vmatpush1.msra.mxu0 %v114
      %864 = vmatprep.subr.mxu0 %v118
      %865 = vmatpush1.msra.mxu0 %v117
      %866 = vmatprep.subr.mxu0 0.0
      %867 = vmatpush1.msra.mxu0 0.0
      %868 = vmatprep.subr.mxu0 0.0
      %869 = vmatpush1.msra.mxu0 0.0
      %870 = vmatprep.subr.mxu0 0.0
      %871 = vmatpush1.msra.mxu0 0.0
      %872 = vmatprep.subr.mxu0 0.0
      %873 = vmatpush1.msra.mxu0 0.0
      %874 = vmatprep.subr.mxu0 0.0
      %875 = vmatpush1.msra.mxu0 0.0
      %876 = vmatprep.subr.mxu0 0.0
      %877 = vmatpush1.msra.mxu0 0.0
      %878 = vmatprep.subr.mxu0 0.0
      %879 = vmatpush1.msra.mxu0 0.0
      %880 = vmatprep.subr.mxu0 0.0
      %881 = vmatpush1.msra.mxu0 0.0
      %882 = vmatprep.subr.mxu0 0.0
      %883 = vmatpush1.msra.mxu0 0.0
      %884 = vmatprep.subr.mxu0 0.0
      %885 = vmatpush1.msra.mxu0 0.0
      %886 = vmatprep.subr.mxu0 0.0
      %887 = vmatpush1.msra.mxu0 0.0
      %888 = vmatprep.subr.mxu0 0.0
      %889 = vmatpush1.msra.mxu0 0.0
      %890 = vmatprep.subr.mxu0 0.0
      %891 = vmatpush1.msra.mxu0 0.0
      %892 = vmatprep.subr.mxu0 0.0
      %893 = vmatpush1.msra.mxu0 0.0
      %894 = vmatprep.subr.mxu0 0.0
      %895 = vmatpush1.msra.mxu0 0.0
      %896 = vmatprep.subr.mxu0 0.0
      %897 = vmatpush1.msra.mxu0 0.0
      %898 = vmatprep.mubr.f32.mxu0 0.0
      %899 = vmatmul.mubr.f32.gmra.mrb[0].mxu0 %v820
      %v900 = vpop.f32.mrb[0].mxu0
      %v901 = vadd.f32 0.0, %v900
      %v902 = vpop.f32.mrb[0].mxu0
      %v903 = vadd.f32 0.0, %v902
      %904 = vdwg.mxu0
      %v905 = vadd.f32 %v831, %v901
      %v906 = vxor.u32 %v905, 2147483648
      %v907 = vmul.f32 %v906, 1.442695
      %v908 = vpow.pop %v907
      %v909 = vadd.f32 %v908, 1.0
      %v910 = vrcp.pop %v909
      %v911 = vmul.f32 1.0, %v910
      %v912 = vadd.f32 %v832, %v903
      %v913 = vxor.u32 %v912, 2147483648
      %v914 = vmul.f32 %v913, 1.442695
      %v915 = vpow.pop %v914
      %v916 = vadd.f32 %v915, 1.0
      %v917 = vrcp.pop %v916
      %v918 = vmul.f32 1.0, %v917
      %919 = vmatprep.subr.mxu0 0.0
      %920 = vmatpush1.msra.mxu0 %v74
      %921 = vmatprep.subr.mxu0 0.0
      %922 = vmatpush1.msra.mxu0 %v77
      %923 = vmatprep.subr.mxu0 0.0
      %924 = vmatpush1.msra.mxu0 %v80
      %925 = vmatprep.subr.mxu0 0.0
      %926 = vmatpush1.msra.mxu0 %v83
      %927 = vmatprep.subr.mxu0 0.0
      %928 = vmatpush1.msra.mxu0 %v86
      %929 = vmatprep.subr.mxu0 0.0
      %930 = vmatpush1.msra.mxu0 %v89
      %931 = vmatprep.subr.mxu0 0.0
      %932 = vmatpush1.msra.mxu0 %v92
      %933 = vmatprep.subr.mxu0 0.0
      %934 = vmatpush1.msra.mxu0 %v95
      %935 = vmatprep.subr.mxu0 0.0
      %936 = vmatpush1.msra.mxu0 %v98
      %937 = vmatprep.subr.mxu0 0.0
      %938 = vmatpush1.msra.mxu0 %v101
      %939 = vmatprep.subr.mxu0 0.0
      %940 = vmatpush1.msra.mxu0 %v104
      %941 = vmatprep.subr.mxu0 0.0
      %942 = vmatpush1.msra.mxu0 %v107
      %943 = vmatprep.subr.mxu0 0.0
      %944 = vmatpush1.msra.mxu0 %v110
      %945 = vmatprep.subr.mxu0 0.0
      %946 = vmatpush1.msra.mxu0 %v113
      %947 = vmatprep.subr.mxu0 0.0
      %948 = vmatpush1.msra.mxu0 %v116
      %949 = vmatprep.subr.mxu0 0.0
      %950 = vmatpush1.msra.mxu0 %v119
      %951 = vmatprep.subr.mxu0 0.0
      %952 = vmatpush1.msra.mxu0 0.0
      %953 = vmatprep.subr.mxu0 0.0
      %954 = vmatpush1.msra.mxu0 0.0
      %955 = vmatprep.subr.mxu0 0.0
      %956 = vmatpush1.msra.mxu0 0.0
      %957 = vmatprep.subr.mxu0 0.0
      %958 = vmatpush1.msra.mxu0 0.0
      %959 = vmatprep.subr.mxu0 0.0
      %960 = vmatpush1.msra.mxu0 0.0
      %961 = vmatprep.subr.mxu0 0.0
      %962 = vmatpush1.msra.mxu0 0.0
      %963 = vmatprep.subr.mxu0 0.0
      %964 = vmatpush1.msra.mxu0 0.0
      %965 = vmatprep.subr.mxu0 0.0
      %966 = vmatpush1.msra.mxu0 0.0
      %967 = vmatprep.subr.mxu0 0.0
      %968 = vmatpush1.msra.mxu0 0.0
      %969 = vmatprep.subr.mxu0 0.0
      %970 = vmatpush1.msra.mxu0 0.0
      %971 = vmatprep.subr.mxu0 0.0
      %972 = vmatpush1.msra.mxu0 0.0
      %973 = vmatprep.subr.mxu0 0.0
      %974 = vmatpush1.msra.mxu0 0.0
      %975 = vmatprep.subr.mxu0 0.0
      %976 = vmatpush1.msra.mxu0 0.0
      %977 = vmatprep.subr.mxu0 0.0
      %978 = vmatpush1.msra.mxu0 0.0
      %979 = vmatprep.subr.mxu0 0.0
      %980 = vmatpush1.msra.mxu0 0.0
      %981 = vmatprep.subr.mxu0 0.0
      %982 = vmatpush1.msra.mxu0 0.0
      %983 = vmatprep.mubr.f32.mxu0 0.0
      %984 = vmatmul.mubr.f32.gmra.mrb[0].mxu0 %v820
      %v985 = vpop.f32.mrb[0].mxu0
      %v986 = vadd.f32 %v217, %v985
      %v987 = vpop.f32.mrb[0].mxu0
      %988 = vdwg.mxu0
      %v989 = vmul.f32 %v911, %v986
      %v990 = vadd.f32 %v833, %v989
      %v991 = vtanh.pop %v990
      %v992 = vsub.f32 1.0, %v918
      %v993 = vmul.f32 %v992, %v991
      %v994 = vmul.f32 %v918, %v820
      %v995 = vadd.f32 %v993, %v994
      %s996 = sadd.s32 %s122, 5
      %v997 = vstv %s996
      %vm998 = vcmp.eq.s32.totalorder %v121, %v997
      %v999 = vsel %vm998, 1, 0
      %1000 = vset.pattern.permute.xlu0 0
      %1001 = vperm.xlu0 %1000, %v999
      %v1002 = vpop.permute.xlu0 %1001
      %vm1003 = vcmp.eq.s32.totalorder %v1002, 1
      %v1004 = vsel %vm1003, %v995, %v829
      %s1005 = scalar_lea.vmem [#allocation5], 120
      %v1006 = vld [vmem:[%s1005] sm:$0xff]
      %v1007 = vld [vmem:[%s1005 + $0x8] sm:$0xff]
      %v1008 = vld [vmem:[%s1005 + $0x10] sm:$0xff]
      %1009 = vmatprep.subr.mxu0 %v73
      %1010 = vmatpush1.msra.mxu0 %v72
      %1011 = vmatprep.subr.mxu0 %v76
      %1012 = vmatpush1.msra.mxu0 %v75
      %1013 = vmatprep.subr.mxu0 %v79
      %1014 = vmatpush1.msra.mxu0 %v78
      %1015 = vmatprep.subr.mxu0 %v82
      %1016 = vmatpush1.msra.mxu0 %v81
      %1017 = vmatprep.subr.mxu0 %v85
      %1018 = vmatpush1.msra.mxu0 %v84
      %1019 = vmatprep.subr.mxu0 %v88
      %1020 = vmatpush1.msra.mxu0 %v87
      %1021 = vmatprep.subr.mxu0 %v91
      %1022 = vmatpush1.msra.mxu0 %v90
      %1023 = vmatprep.subr.mxu0 %v94
      %1024 = vmatpush1.msra.mxu0 %v93
      %1025 = vmatprep.subr.mxu0 %v97
      %1026 = vmatpush1.msra.mxu0 %v96
      %1027 = vmatprep.subr.mxu0 %v100
      %1028 = vmatpush1.msra.mxu0 %v99
      %1029 = vmatprep.subr.mxu0 %v103
      %1030 = vmatpush1.msra.mxu0 %v102
      %1031 = vmatprep.subr.mxu0 %v106
      %1032 = vmatpush1.msra.mxu0 %v105
      %1033 = vmatprep.subr.mxu0 %v109
      %1034 = vmatpush1.msra.mxu0 %v108
      %1035 = vmatprep.subr.mxu0 %v112
      %1036 = vmatpush1.msra.mxu0 %v111
      %1037 = vmatprep.subr.mxu0 %v115
      %1038 = vmatpush1.msra.mxu0 %v114
      %1039 = vmatprep.subr.mxu0 %v118
      %1040 = vmatpush1.msra.mxu0 %v117
      %1041 = vmatprep.subr.mxu0 0.0
      %1042 = vmatpush1.msra.mxu0 0.0
      %1043 = vmatprep.subr.mxu0 0.0
      %1044 = vmatpush1.msra.mxu0 0.0
      %1045 = vmatprep.subr.mxu0 0.0
      %1046 = vmatpush1.msra.mxu0 0.0
      %1047 = vmatprep.subr.mxu0 0.0
      %1048 = vmatpush1.msra.mxu0 0.0
      %1049 = vmatprep.subr.mxu0 0.0
      %1050 = vmatpush1.msra.mxu0 0.0
      %1051 = vmatprep.subr.mxu0 0.0
      %1052 = vmatpush1.msra.mxu0 0.0
      %1053 = vmatprep.subr.mxu0 0.0
      %1054 = vmatpush1.msra.mxu0 0.0
      %1055 = vmatprep.subr.mxu0 0.0
      %1056 = vmatpush1.msra.mxu0 0.0
      %1057 = vmatprep.subr.mxu0 0.0
      %1058 = vmatpush1.msra.mxu0 0.0
      %1059 = vmatprep.subr.mxu0 0.0
      %1060 = vmatpush1.msra.mxu0 0.0
      %1061 = vmatprep.subr.mxu0 0.0
      %1062 = vmatpush1.msra.mxu0 0.0
      %1063 = vmatprep.subr.mxu0 0.0
      %1064 = vmatpush1.msra.mxu0 0.0
      %1065 = vmatprep.subr.mxu0 0.0
      %1066 = vmatpush1.msra.mxu0 0.0
      %1067 = vmatprep.subr.mxu0 0.0
      %1068 = vmatpush1.msra.mxu0 0.0
      %1069 = vmatprep.subr.mxu0 0.0
      %1070 = vmatpush1.msra.mxu0 0.0
      %1071 = vmatprep.subr.mxu0 0.0
      %1072 = vmatpush1.msra.mxu0 0.0
      %1073 = vmatprep.mubr.f32.mxu0 0.0
      %1074 = vmatmul.mubr.f32.gmra.mrb[0].mxu0 %v995
      %v1075 = vpop.f32.mrb[0].mxu0
      %v1076 = vadd.f32 0.0, %v1075
      %v1077 = vpop.f32.mrb[0].mxu0
      %v1078 = vadd.f32 0.0, %v1077
      %1079 = vdwg.mxu0
      %v1080 = vadd.f32 %v1006, %v1076
      %v1081 = vxor.u32 %v1080, 2147483648
      %v1082 = vmul.f32 %v1081, 1.442695
      %v1083 = vpow.pop %v1082
      %v1084 = vadd.f32 %v1083, 1.0
      %v1085 = vrcp.pop %v1084
      %v1086 = vmul.f32 1.0, %v1085
      %v1087 = vadd.f32 %v1007, %v1078
      %v1088 = vxor.u32 %v1087, 2147483648
      %v1089 = vmul.f32 %v1088, 1.442695
      %v1090 = vpow.pop %v1089
      %v1091 = vadd.f32 %v1090, 1.0
      %v1092 = vrcp.pop %v1091
      %v1093 = vmul.f32 1.0, %v1092
      %1094 = vmatprep.subr.mxu0 0.0
      %1095 = vmatpush1.msra.mxu0 %v74
      %1096 = vmatprep.subr.mxu0 0.0
      %1097 = vmatpush1.msra.mxu0 %v77
      %1098 = vmatprep.subr.mxu0 0.0
      %1099 = vmatpush1.msra.mxu0 %v80
      %1100 = vmatprep.subr.mxu0 0.0
      %1101 = vmatpush1.msra.mxu0 %v83
      %1102 = vmatprep.subr.mxu0 0.0
      %1103 = vmatpush1.msra.mxu0 %v86
      %1104 = vmatprep.subr.mxu0 0.0
      %1105 = vmatpush1.msra.mxu0 %v89
      %1106 = vmatprep.subr.mxu0 0.0
      %1107 = vmatpush1.msra.mxu0 %v92
      %1108 = vmatprep.subr.mxu0 0.0
      %1109 = vmatpush1.msra.mxu0 %v95
      %1110 = vmatprep.subr.mxu0 0.0
      %1111 = vmatpush1.msra.mxu0 %v98
      %1112 = vmatprep.subr.mxu0 0.0
      %1113 = vmatpush1.msra.mxu0 %v101
      %1114 = vmatprep.subr.mxu0 0.0
      %1115 = vmatpush1.msra.mxu0 %v104
      %1116 = vmatprep.subr.mxu0 0.0
      %1117 = vmatpush1.msra.mxu0 %v107
      %1118 = vmatprep.subr.mxu0 0.0
      %1119 = vmatpush1.msra.mxu0 %v110
      %1120 = vmatprep.subr.mxu0 0.0
      %1121 = vmatpush1.msra.mxu0 %v113
      %1122 = vmatprep.subr.mxu0 0.0
      %1123 = vmatpush1.msra.mxu0 %v116
      %1124 = vmatprep.subr.mxu0 0.0
      %1125 = vmatpush1.msra.mxu0 %v119
      %1126 = vmatprep.subr.mxu0 0.0
      %1127 = vmatpush1.msra.mxu0 0.0
      %1128 = vmatprep.subr.mxu0 0.0
      %1129 = vmatpush1.msra.mxu0 0.0
      %1130 = vmatprep.subr.mxu0 0.0
      %1131 = vmatpush1.msra.mxu0 0.0
      %1132 = vmatprep.subr.mxu0 0.0
      %1133 = vmatpush1.msra.mxu0 0.0
      %1134 = vmatprep.subr.mxu0 0.0
      %1135 = vmatpush1.msra.mxu0 0.0
      %1136 = vmatprep.subr.mxu0 0.0
      %1137 = vmatpush1.msra.mxu0 0.0
      %1138 = vmatprep.subr.mxu0 0.0
      %1139 = vmatpush1.msra.mxu0 0.0
      %1140 = vmatprep.subr.mxu0 0.0
      %1141 = vmatpush1.msra.mxu0 0.0
      %1142 = vmatprep.subr.mxu0 0.0
      %1143 = vmatpush1.msra.mxu0 0.0
      %1144 = vmatprep.subr.mxu0 0.0
      %1145 = vmatpush1.msra.mxu0 0.0
      %1146 = vmatprep.subr.mxu0 0.0
      %1147 = vmatpush1.msra.mxu0 0.0
      %1148 = vmatprep.subr.mxu0 0.0
      %1149 = vmatpush1.msra.mxu0 0.0
      %1150 = vmatprep.subr.mxu0 0.0
      %1151 = vmatpush1.msra.mxu0 0.0
      %1152 = vmatprep.subr.mxu0 0.0
      %1153 = vmatpush1.msra.mxu0 0.0
      %1154 = vmatprep.subr.mxu0 0.0
      %1155 = vmatpush1.msra.mxu0 0.0
      %1156 = vmatprep.subr.mxu0 0.0
      %1157 = vmatpush1.msra.mxu0 0.0
      %1158 = vmatprep.mubr.f32.mxu0 0.0
      %1159 = vmatmul.mubr.f32.gmra.mrb[0].mxu0 %v995
      %v1160 = vpop.f32.mrb[0].mxu0
      %v1161 = vadd.f32 %v217, %v1160
      %v1162 = vpop.f32.mrb[0].mxu0
      %1163 = vdwg.mxu0
      %v1164 = vmul.f32 %v1086, %v1161
      %v1165 = vadd.f32 %v1008, %v1164
      %v1166 = vtanh.pop %v1165
      %v1167 = vsub.f32 1.0, %v1093
      %v1168 = vmul.f32 %v1167, %v1166
      %v1169 = vmul.f32 %v1093, %v995
      %v1170 = vadd.f32 %v1168, %v1169
      %s1171 = sadd.s32 %s122, 6
      %v1172 = vstv %s1171
      %vm1173 = vcmp.eq.s32.totalorder %v121, %v1172
      %v1174 = vsel %vm1173, 1, 0
      %1175 = vset.pattern.permute.xlu0 0
      %1176 = vperm.xlu0 %1175, %v1174
      %v1177 = vpop.permute.xlu0 %1176
      %vm1178 = vcmp.eq.s32.totalorder %v1177, 1
      %v1179 = vsel %vm1178, %v1170, %v1004
      %s1180 = scalar_lea.vmem [#allocation5], 144
      %v1181 = vld [vmem:[%s1180] sm:$0xff]
      %v1182 = vld [vmem:[%s1180 + $0x8] sm:$0xff]
      %v1183 = vld [vmem:[%s1180 + $0x10] sm:$0xff]
      %1184 = vmatprep.subr.mxu0 %v73
      %1185 = vmatpush1.msra.mxu0 %v72
      %1186 = vmatprep.subr.mxu0 %v76
      %1187 = vmatpush1.msra.mxu0 %v75
      %1188 = vmatprep.subr.mxu0 %v79
      %1189 = vmatpush1.msra.mxu0 %v78
      %1190 = vmatprep.subr.mxu0 %v82
      %1191 = vmatpush1.msra.mxu0 %v81
      %1192 = vmatprep.subr.mxu0 %v85
      %1193 = vmatpush1.msra.mxu0 %v84
      %1194 = vmatprep.subr.mxu0 %v88
      %1195 = vmatpush1.msra.mxu0 %v87
      %1196 = vmatprep.subr.mxu0 %v91
      %1197 = vmatpush1.msra.mxu0 %v90
      %1198 = vmatprep.subr.mxu0 %v94
      %1199 = vmatpush1.msra.mxu0 %v93
      %1200 = vmatprep.subr.mxu0 %v97
      %1201 = vmatpush1.msra.mxu0 %v96
      %1202 = vmatprep.subr.mxu0 %v100
      %1203 = vmatpush1.msra.mxu0 %v99
      %1204 = vmatprep.subr.mxu0 %v103
      %1205 = vmatpush1.msra.mxu0 %v102
      %1206 = vmatprep.subr.mxu0 %v106
      %1207 = vmatpush1.msra.mxu0 %v105
      %1208 = vmatprep.subr.mxu0 %v109
      %1209 = vmatpush1.msra.mxu0 %v108
      %1210 = vmatprep.subr.mxu0 %v112
      %1211 = vmatpush1.msra.mxu0 %v111
      %1212 = vmatprep.subr.mxu0 %v115
      %1213 = vmatpush1.msra.mxu0 %v114
      %1214 = vmatprep.subr.mxu0 %v118
      %1215 = vmatpush1.msra.mxu0 %v117
      %1216 = vmatprep.subr.mxu0 0.0
      %1217 = vmatpush1.msra.mxu0 0.0
      %1218 = vmatprep.subr.mxu0 0.0
      %1219 = vmatpush1.msra.mxu0 0.0
      %1220 = vmatprep.subr.mxu0 0.0
      %1221 = vmatpush1.msra.mxu0 0.0
      %1222 = vmatprep.subr.mxu0 0.0
      %1223 = vmatpush1.msra.mxu0 0.0
      %1224 = vmatprep.subr.mxu0 0.0
      %1225 = vmatpush1.msra.mxu0 0.0
      %1226 = vmatprep.subr.mxu0 0.0
      %1227 = vmatpush1.msra.mxu0 0.0
      %1228 = vmatprep.subr.mxu0 0.0
      %1229 = vmatpush1.msra.mxu0 0.0
      %1230 = vmatprep.subr.mxu0 0.0
      %1231 = vmatpush1.msra.mxu0 0.0
      %1232 = vmatprep.subr.mxu0 0.0
      %1233 = vmatpush1.msra.mxu0 0.0
      %1234 = vmatprep.subr.mxu0 0.0
      %1235 = vmatpush1.msra.mxu0 0.0
      %1236 = vmatprep.subr.mxu0 0.0
      %1237 = vmatpush1.msra.mxu0 0.0
      %1238 = vmatprep.subr.mxu0 0.0
      %1239 = vmatpush1.msra.mxu0 0.0
      %1240 = vmatprep.subr.mxu0 0.0
      %1241 = vmatpush1.msra.mxu0 0.0
      %1242 = vmatprep.subr.mxu0 0.0
      %1243 = vmatpush1.msra.mxu0 0.0
      %1244 = vmatprep.subr.mxu0 0.0
      %1245 = vmatpush1.msra.mxu0 0.0
      %1246 = vmatprep.subr.mxu0 0.0
      %1247 = vmatpush1.msra.mxu0 0.0
      %1248 = vmatprep.mubr.f32.mxu0 0.0
      %1249 = vmatmul.mubr.f32.gmra.mrb[0].mxu0 %v1170
      %v1250 = vpop.f32.mrb[0].mxu0
      %v1251 = vadd.f32 0.0, %v1250
      %v1252 = vpop.f32.mrb[0].mxu0
      %v1253 = vadd.f32 0.0, %v1252
      %1254 = vdwg.mxu0
      %v1255 = vadd.f32 %v1181, %v1251
      %v1256 = vxor.u32 %v1255, 2147483648
      %v1257 = vmul.f32 %v1256, 1.442695
      %v1258 = vpow.pop %v1257
      %v1259 = vadd.f32 %v1258, 1.0
      %v1260 = vrcp.pop %v1259
      %v1261 = vmul.f32 1.0, %v1260
      %v1262 = vadd.f32 %v1182, %v1253
      %v1263 = vxor.u32 %v1262, 2147483648
      %v1264 = vmul.f32 %v1263, 1.442695
      %v1265 = vpow.pop %v1264
      %v1266 = vadd.f32 %v1265, 1.0
      %v1267 = vrcp.pop %v1266
      %v1268 = vmul.f32 1.0, %v1267
      %1269 = vmatprep.subr.mxu0 0.0
      %1270 = vmatpush1.msra.mxu0 %v74
      %1271 = vmatprep.subr.mxu0 0.0
      %1272 = vmatpush1.msra.mxu0 %v77
      %1273 = vmatprep.subr.mxu0 0.0
      %1274 = vmatpush1.msra.mxu0 %v80
      %1275 = vmatprep.subr.mxu0 0.0
      %1276 = vmatpush1.msra.mxu0 %v83
      %1277 = vmatprep.subr.mxu0 0.0
      %1278 = vmatpush1.msra.mxu0 %v86
      %1279 = vmatprep.subr.mxu0 0.0
      %1280 = vmatpush1.msra.mxu0 %v89
      %1281 = vmatprep.subr.mxu0 0.0
      %1282 = vmatpush1.msra.mxu0 %v92
      %1283 = vmatprep.subr.mxu0 0.0
      %1284 = vmatpush1.msra.mxu0 %v95
      %1285 = vmatprep.subr.mxu0 0.0
      %1286 = vmatpush1.msra.mxu0 %v98
      %1287 = vmatprep.subr.mxu0 0.0
      %1288 = vmatpush1.msra.mxu0 %v101
      %1289 = vmatprep.subr.mxu0 0.0
      %1290 = vmatpush1.msra.mxu0 %v104
      %1291 = vmatprep.subr.mxu0 0.0
      %1292 = vmatpush1.msra.mxu0 %v107
      %1293 = vmatprep.subr.mxu0 0.0
      %1294 = vmatpush1.msra.mxu0 %v110
      %1295 = vmatprep.subr.mxu0 0.0
      %1296 = vmatpush1.msra.mxu0 %v113
      %1297 = vmatprep.subr.mxu0 0.0
      %1298 = vmatpush1.msra.mxu0 %v116
      %1299 = vmatprep.subr.mxu0 0.0
      %1300 = vmatpush1.msra.mxu0 %v119
      %1301 = vmatprep.subr.mxu0 0.0
      %1302 = vmatpush1.msra.mxu0 0.0
      %1303 = vmatprep.subr.mxu0 0.0
      %1304 = vmatpush1.msra.mxu0 0.0
      %1305 = vmatprep.subr.mxu0 0.0
      %1306 = vmatpush1.msra.mxu0 0.0
      %1307 = vmatprep.subr.mxu0 0.0
      %1308 = vmatpush1.msra.mxu0 0.0
      %1309 = vmatprep.subr.mxu0 0.0
      %1310 = vmatpush1.msra.mxu0 0.0
      %1311 = vmatprep.subr.mxu0 0.0
      %1312 = vmatpush1.msra.mxu0 0.0
      %1313 = vmatprep.subr.mxu0 0.0
      %1314 = vmatpush1.msra.mxu0 0.0
      %1315 = vmatprep.subr.mxu0 0.0
      %1316 = vmatpush1.msra.mxu0 0.0
      %1317 = vmatprep.subr.mxu0 0.0
      %1318 = vmatpush1.msra.mxu0 0.0
      %1319 = vmatprep.subr.mxu0 0.0
      %1320 = vmatpush1.msra.mxu0 0.0
      %1321 = vmatprep.subr.mxu0 0.0
      %1322 = vmatpush1.msra.mxu0 0.0
      %1323 = vmatprep.subr.mxu0 0.0
      %1324 = vmatpush1.msra.mxu0 0.0
      %1325 = vmatprep.subr.mxu0 0.0
      %1326 = vmatpush1.msra.mxu0 0.0
      %1327 = vmatprep.subr.mxu0 0.0
      %1328 = vmatpush1.msra.mxu0 0.0
      %1329 = vmatprep.subr.mxu0 0.0
      %1330 = vmatpush1.msra.mxu0 0.0
      %1331 = vmatprep.subr.mxu0 0.0
      %1332 = vmatpush1.msra.mxu0 0.0
      %1333 = vmatprep.mubr.f32.mxu0 0.0
      %1334 = vmatmul.mubr.f32.gmra.mrb[0].mxu0 %v1170
      %v1335 = vpop.f32.mrb[0].mxu0
      %v1336 = vadd.f32 %v217, %v1335
      %v1337 = vpop.f32.mrb[0].mxu0
      %1338 = vdwg.mxu0
      %v1339 = vmul.f32 %v1261, %v1336
      %v1340 = vadd.f32 %v1183, %v1339
      %v1341 = vtanh.pop %v1340
      %v1342 = vsub.f32 1.0, %v1268
      %v1343 = vmul.f32 %v1342, %v1341
      %v1344 = vmul.f32 %v1268, %v1170
      %v1345 = vadd.f32 %v1343, %v1344
      %s1346 = sadd.s32 %s122, 7
      %v1347 = vstv %s1346
      %vm1348 = vcmp.eq.s32.totalorder %v121, %v1347
      %v1349 = vsel %vm1348, 1, 0
      %1350 = vset.pattern.permute.xlu0 0
      %1351 = vperm.xlu0 %1350, %v1349
      %v1352 = vpop.permute.xlu0 %1351
      %vm1353 = vcmp.eq.s32.totalorder %v1352, 1
      %v1354 = vsel %vm1353, %v1345, %v1179
      %s1355 = scalar_lea.vmem [#allocation5], 168
      %v1356 = vld [vmem:[%s1355] sm:$0xff]
      %v1357 = vld [vmem:[%s1355 + $0x8] sm:$0xff]
      %v1358 = vld [vmem:[%s1355 + $0x10] sm:$0xff]
      %1359 = vmatprep.subr.mxu0 %v73
      %1360 = vmatpush1.msra.mxu0 %v72
      %1361 = vmatprep.subr.mxu0 %v76
      %1362 = vmatpush1.msra.mxu0 %v75
      %1363 = vmatprep.subr.mxu0 %v79
      %1364 = vmatpush1.msra.mxu0 %v78
      %1365 = vmatprep.subr.mxu0 %v82
      %1366 = vmatpush1.msra.mxu0 %v81
      %1367 = vmatprep.subr.mxu0 %v85
      %1368 = vmatpush1.msra.mxu0 %v84
      %1369 = vmatprep.subr.mxu0 %v88
      %1370 = vmatpush1.msra.mxu0 %v87
      %1371 = vmatprep.subr.mxu0 %v91
      %1372 = vmatpush1.msra.mxu0 %v90
      %1373 = vmatprep.subr.mxu0 %v94
      %1374 = vmatpush1.msra.mxu0 %v93
      %1375 = vmatprep.subr.mxu0 %v97
      %1376 = vmatpush1.msra.mxu0 %v96
      %1377 = vmatprep.subr.mxu0 %v100
      %1378 = vmatpush1.msra.mxu0 %v99
      %1379 = vmatprep.subr.mxu0 %v103
      %1380 = vmatpush1.msra.mxu0 %v102
      %1381 = vmatprep.subr.mxu0 %v106
      %1382 = vmatpush1.msra.mxu0 %v105
      %1383 = vmatprep.subr.mxu0 %v109
      %1384 = vmatpush1.msra.mxu0 %v108
      %1385 = vmatprep.subr.mxu0 %v112
      %1386 = vmatpush1.msra.mxu0 %v111
      %1387 = vmatprep.subr.mxu0 %v115
      %1388 = vmatpush1.msra.mxu0 %v114
      %1389 = vmatprep.subr.mxu0 %v118
      %1390 = vmatpush1.msra.mxu0 %v117
      %1391 = vmatprep.subr.mxu0 0.0
      %1392 = vmatpush1.msra.mxu0 0.0
      %1393 = vmatprep.subr.mxu0 0.0
      %1394 = vmatpush1.msra.mxu0 0.0
      %1395 = vmatprep.subr.mxu0 0.0
      %1396 = vmatpush1.msra.mxu0 0.0
      %1397 = vmatprep.subr.mxu0 0.0
      %1398 = vmatpush1.msra.mxu0 0.0
      %1399 = vmatprep.subr.mxu0 0.0
      %1400 = vmatpush1.msra.mxu0 0.0
      %1401 = vmatprep.subr.mxu0 0.0
      %1402 = vmatpush1.msra.mxu0 0.0
      %1403 = vmatprep.subr.mxu0 0.0
      %1404 = vmatpush1.msra.mxu0 0.0
      %1405 = vmatprep.subr.mxu0 0.0
      %1406 = vmatpush1.msra.mxu0 0.0
      %1407 = vmatprep.subr.mxu0 0.0
      %1408 = vmatpush1.msra.mxu0 0.0
      %1409 = vmatprep.subr.mxu0 0.0
      %1410 = vmatpush1.msra.mxu0 0.0
      %1411 = vmatprep.subr.mxu0 0.0
      %1412 = vmatpush1.msra.mxu0 0.0
      %1413 = vmatprep.subr.mxu0 0.0
      %1414 = vmatpush1.msra.mxu0 0.0
      %1415 = vmatprep.subr.mxu0 0.0
      %1416 = vmatpush1.msra.mxu0 0.0
      %1417 = vmatprep.subr.mxu0 0.0
      %1418 = vmatpush1.msra.mxu0 0.0
      %1419 = vmatprep.subr.mxu0 0.0
      %1420 = vmatpush1.msra.mxu0 0.0
      %1421 = vmatprep.subr.mxu0 0.0
      %1422 = vmatpush1.msra.mxu0 0.0
      %1423 = vmatprep.mubr.f32.mxu0 0.0
      %1424 = vmatmul.mubr.f32.gmra.mrb[0].mxu0 %v1345
      %v1425 = vpop.f32.mrb[0].mxu0
      %v1426 = vadd.f32 0.0, %v1425
      %v1427 = vpop.f32.mrb[0].mxu0
      %v1428 = vadd.f32 0.0, %v1427
      %1429 = vdwg.mxu0
      %v1430 = vadd.f32 %v1356, %v1426
      %v1431 = vxor.u32 %v1430, 2147483648
      %v1432 = vmul.f32 %v1431, 1.442695
      %v1433 = vpow.pop %v1432
      %v1434 = vadd.f32 %v1433, 1.0
      %v1435 = vrcp.pop %v1434
      %v1436 = vmul.f32 1.0, %v1435
      %v1437 = vadd.f32 %v1357, %v1428
      %v1438 = vxor.u32 %v1437, 2147483648
      %v1439 = vmul.f32 %v1438, 1.442695
      %v1440 = vpow.pop %v1439
      %v1441 = vadd.f32 %v1440, 1.0
      %v1442 = vrcp.pop %v1441
      %v1443 = vmul.f32 1.0, %v1442
      %1444 = vmatprep.subr.mxu0 0.0
      %1445 = vmatpush1.msra.mxu0 %v74
      %1446 = vmatprep.subr.mxu0 0.0
      %1447 = vmatpush1.msra.mxu0 %v77
      %1448 = vmatprep.subr.mxu0 0.0
      %1449 = vmatpush1.msra.mxu0 %v80
      %1450 = vmatprep.subr.mxu0 0.0
      %1451 = vmatpush1.msra.mxu0 %v83
      %1452 = vmatprep.subr.mxu0 0.0
      %1453 = vmatpush1.msra.mxu0 %v86
      %1454 = vmatprep.subr.mxu0 0.0
      %1455 = vmatpush1.msra.mxu0 %v89
      %1456 = vmatprep.subr.mxu0 0.0
      %1457 = vmatpush1.msra.mxu0 %v92
      %1458 = vmatprep.subr.mxu0 0.0
      %1459 = vmatpush1.msra.mxu0 %v95
      %1460 = vmatprep.subr.mxu0 0.0
      %1461 = vmatpush1.msra.mxu0 %v98
      %1462 = vmatprep.subr.mxu0 0.0
      %1463 = vmatpush1.msra.mxu0 %v101
      %1464 = vmatprep.subr.mxu0 0.0
      %1465 = vmatpush1.msra.mxu0 %v104
      %1466 = vmatprep.subr.mxu0 0.0
      %1467 = vmatpush1.msra.mxu0 %v107
      %1468 = vmatprep.subr.mxu0 0.0
      %1469 = vmatpush1.msra.mxu0 %v110
      %1470 = vmatprep.subr.mxu0 0.0
      %1471 = vmatpush1.msra.mxu0 %v113
      %1472 = vmatprep.subr.mxu0 0.0
      %1473 = vmatpush1.msra.mxu0 %v116
      %1474 = vmatprep.subr.mxu0 0.0
      %1475 = vmatpush1.msra.mxu0 %v119
      %1476 = vmatprep.subr.mxu0 0.0
      %1477 = vmatpush1.msra.mxu0 0.0
      %1478 = vmatprep.subr.mxu0 0.0
      %1479 = vmatpush1.msra.mxu0 0.0
      %1480 = vmatprep.subr.mxu0 0.0
      %1481 = vmatpush1.msra.mxu0 0.0
      %1482 = vmatprep.subr.mxu0 0.0
      %1483 = vmatpush1.msra.mxu0 0.0
      %1484 = vmatprep.subr.mxu0 0.0
      %1485 = vmatpush1.msra.mxu0 0.0
      %1486 = vmatprep.subr.mxu0 0.0
      %1487 = vmatpush1.msra.mxu0 0.0
      %1488 = vmatprep.subr.mxu0 0.0
      %1489 = vmatpush1.msra.mxu0 0.0
      %1490 = vmatprep.subr.mxu0 0.0
      %1491 = vmatpush1.msra.mxu0 0.0
      %1492 = vmatprep.subr.mxu0 0.0
      %1493 = vmatpush1.msra.mxu0 0.0
      %1494 = vmatprep.subr.mxu0 0.0
      %1495 = vmatpush1.msra.mxu0 0.0
      %1496 = vmatprep.subr.mxu0 0.0
      %1497 = vmatpush1.msra.mxu0 0.0
      %1498 = vmatprep.subr.mxu0 0.0
      %1499 = vmatpush1.msra.mxu0 0.0
      %1500 = vmatprep.subr.mxu0 0.0
      %1501 = vmatpush1.msra.mxu0 0.0
      %1502 = vmatprep.subr.mxu0 0.0
      %1503 = vmatpush1.msra.mxu0 0.0
      %1504 = vmatprep.subr.mxu0 0.0
      %1505 = vmatpush1.msra.mxu0 0.0
      %1506 = vmatprep.subr.mxu0 0.0
      %1507 = vmatpush1.msra.mxu0 0.0
      %1508 = vmatprep.mubr.f32.mxu0 0.0
      %1509 = vmatmul.mubr.f32.gmra.mrb[0].mxu0 %v1345
      %v1510 = vpop.f32.mrb[0].mxu0
      %v1511 = vadd.f32 %v217, %v1510
      %v1512 = vpop.f32.mrb[0].mxu0
      %1513 = vdwg.mxu0
      %v1514 = vmul.f32 %v1436, %v1511
      %v1515 = vadd.f32 %v1358, %v1514
      %v1516 = vtanh.pop %v1515
      %v1517 = vsub.f32 1.0, %v1443
      %v1518 = vmul.f32 %v1517, %v1516
      %v1519 = vmul.f32 %v1443, %v1345
      %v1520 = vadd.f32 %v1518, %v1519
      %s1521 = sadd.s32 %s122, 8
      %v1522 = vstv %s1521
      %vm1523 = vcmp.eq.s32.totalorder %v121, %v1522
      %v1524 = vsel %vm1523, 1, 0
      %1525 = vset.pattern.permute.xlu0 0
      %1526 = vperm.xlu0 %1525, %v1524
      %v1527 = vpop.permute.xlu0 %1526
      %vm1528 = vcmp.eq.s32.totalorder %v1527, 1
      %v1529 = vsel %vm1528, %v1520, %v1354
      %1530 = vst [vmem:[#allocation2] sm:$0xff] %v1520
      %1531 = vst [vmem:[#allocation10] sm:$0xff] %v1529
    $region33: #{tpu_custom_call.1} parent=1 // pred_fallthru
      _
    // Predicated region
    $region34: #{tpu_custom_call.1} parent=1 // pred_check
      _
    $region35: #{tpu_custom_call.1} parent=1 // pred_check_branch
      %1533 = sbr.rel (0) target = $region37
    $region36: #{tpu_custom_call.1} parent=1 // pred_region
      %s1535 = ssub.s32 128, 128
      %1536 = vsyncadd [#allocation7], %s1535
      %s1538 = sshll.u32 [#allocation10], 4
      %s1539 = int_to_ptr.vmem [resolvable:$true] %s1538
      %1541 = dma.vmem_to_hbm [thread:$0]  %s1539, 128, %s5, [#allocation7]
    $region37: #{tpu_custom_call.1} parent=1 // pred_fallthru
      _
    // Predicated region
    $region38: #{tpu_custom_call.1} parent=1 // pred_check
      _
    $region39: #{tpu_custom_call.1} parent=1 // pred_check_branch
      %1543 = sbr.rel (0) target = $region41
    $region40: #{tpu_custom_call.1} parent=1 // pred_region
      %1544 = dma.done [#allocation7], 128
    $region41: #{tpu_custom_call.1} parent=1 // pred_fallthru
      _
    %1545 = vsyncpa [#allocation6], 1
    %1546 = vsyncpa [#allocation9], 1
    %1547 = vsyncpa [#allocation7], 1

</llo_original>
